<compile_context>
chip_gen: v6e
topology: v6e:2x2x1
jax: 0.10.0
libtpu: 0.0.40
codegen_flags: <defaults>
</compile_context>

<pallas_src>
import functools

import jax
import jax.numpy as jnp
from jax.experimental import pallas as pl
from jax.experimental.pallas import tpu as pltpu

NEG_SLOPE = 0.2
BN_EPS = 1e-5
MXU_DTYPE = jnp.bfloat16     # matmul operand dtype (accumulation stays f32)
LANE = 128
COORD_PAD = 8                # xyz coordinate channels padded 3 -> 8


def _leaky(y):
    return jnp.where(y >= 0, y, NEG_SLOPE * y)


def _round_up(x, m):
    return ((x + m - 1) // m) * m


def _tile_of(total, cap, quantum=LANE):
    """Largest multiple of `quantum` that divides `total` and is <= cap (total % quantum == 0)."""
    best = quantum
    d = quantum
    lim = min(cap, total)
    while d <= lim:
        if total % d == 0:
            best = d
        d += quantum
    return best


def _fold_rows(w, scale):
    """Fold BN scale into the output-channel rows of a [Cout, Cin] weight."""
    return w.astype(jnp.float32) * scale.astype(jnp.float32)[:, None]


def _col(v):
    return v.reshape(-1, 1).astype(jnp.float32)


# ---------------------------------------------------------------------------
# Kernel 1: conv1 (1x1 Conv1d + folded BN + LeakyReLU), lane-dense, bf16 out
# ---------------------------------------------------------------------------
def _conv1_kernel(x_ref, w_ref, b_ref, o_ref):
    y = jnp.dot(w_ref[...], x_ref[0], preferred_element_type=jnp.float32)
    o_ref[0] = _leaky(y + b_ref[...]).astype(o_ref.dtype)


def conv1_bn_leaky(x_bf, w, scale, shift, *, cap=2048):
    # x_bf: [B, Cin, Np] bf16 (points padded); returns [B, planes, Np] bf16
    B, Cin, Np = x_bf.shape
    P = w.shape[0]
    tn = _tile_of(Np, cap)
    wq = _fold_rows(w, scale).astype(MXU_DTYPE)
    return pl.pallas_call(
        _conv1_kernel,
        out_shape=jax.ShapeDtypeStruct((B, P, Np), MXU_DTYPE),
        grid=(B, Np // tn),
        in_specs=[
            pl.BlockSpec((1, Cin, tn), lambda b, j: (b, 0, j)),
            pl.BlockSpec((P, Cin), lambda b, j: (0, 0)),
            pl.BlockSpec((P, 1), lambda b, j: (0, 0)),
        ],
        out_specs=pl.BlockSpec((1, P, tn), lambda b, j: (b, 0, j)),
        compiler_params=pltpu.CompilerParams(
            dimension_semantics=("parallel", "parallel")),
    )(x_bf, wq, _col(shift))


# ---------------------------------------------------------------------------
# Kernel 2: knn pairwise "distance" (torch knn's -||xi - xj||^2), 2-D tiled
# ---------------------------------------------------------------------------
def _pdist_kernel(xt_ref, x_ref, o_ref):
    xt = xt_ref[0]                                                 # [tr, 8]
    xc = x_ref[0]                                                  # [8, tc]
    inner = jnp.dot(xt, xc, preferred_element_type=jnp.float32)    # x^T x
    xx_r = jnp.sum(xt * xt, axis=1, keepdims=True)                 # [tr, 1]
    xx_c = jnp.sum(xc * xc, axis=0, keepdims=True)                 # [1, tc]
    # torch: -xx - (-2 x^T x) - xx^T
    o_ref[0] = 2.0 * inner - xx_r - xx_c


def pairwise_neg_sqdist(xyz8, xyz8_t, *, cap=512):
    # xyz8: [B, 8, Np] f32 (coords + points zero-padded), xyz8_t: [B, Np, 8]
    B, Cp, Np = xyz8.shape
    t = _tile_of(Np, cap)
    return pl.pallas_call(
        _pdist_kernel,
        out_shape=jax.ShapeDtypeStruct((B, Np, Np), jnp.float32),
        grid=(B, Np // t, Np // t),
        in_specs=[
            pl.BlockSpec((1, t, Cp), lambda b, i, j: (b, i, 0)),
            pl.BlockSpec((1, Cp, t), lambda b, i, j: (b, 0, j)),
        ],
        out_specs=pl.BlockSpec((1, t, t), lambda b, i, j: (b, i, j)),
        compiler_params=pltpu.CompilerParams(
            dimension_semantics=("parallel", "parallel", "parallel")),
    )(xyz8_t, xyz8)


# ---------------------------------------------------------------------------
# Kernel 3: fused LPFA (xyz2feature fold + fd + mlp1 + mlp2 + mean over k)
#           + conv2 + shortcut conv + residual add + LeakyReLU.
# Grid: (B, point_tiles, k); k is an "arbitrary" reduction axis accumulated in
# an f32 VMEM scratch; output written only on the last k step (lane-dense).
# ---------------------------------------------------------------------------
def _lpfa_cic_kernel(cx_ref, nx_ref, cf_ref, nf_ref, xs_ref,
                     wctr_ref, wnbr_ref, b9_ref,
                     w1_ref, b1_ref, w2_ref, b2_ref,
                     wc2_ref, wsc_ref, bo_ref,
                     o_ref, hc_ref, acc_ref, *, num_k):
    k = pl.program_id(2)

    @pl.when(k == 0)
    def _init():
        # center-point geometry embedding (k-independent) + BN shift, kept resident
        hc_ref[...] = jnp.dot(wctr_ref[...], cx_ref[0],
                              preferred_element_type=jnp.float32) + b9_ref[...]
        acc_ref[...] = jnp.zeros_like(acc_ref)

    # xyz2feature on this neighbor slab (algebraic fold of the 9-channel concat)
    h = hc_ref[...] + jnp.dot(wnbr_ref[...], nx_ref[0],
                              preferred_element_type=jnp.float32)
    # feature difference computed in-kernel (no fd array materialized in HBM)
    fd = nf_ref[0].astype(jnp.float32) - cf_ref[0].astype(jnp.float32)
    f = _leaky(fd + h)
    h1 = _leaky(jnp.dot(w1_ref[...], f.astype(MXU_DTYPE),
                        preferred_element_type=jnp.float32) + b1_ref[...])
    h2 = _leaky(jnp.dot(w2_ref[...], h1.astype(MXU_DTYPE),
                        preferred_element_type=jnp.float32) + b2_ref[...])
    acc_ref[...] += h2

    @pl.when(k == num_k - 1)
    def _finalize():
        mean_k = (acc_ref[...] * (1.0 / num_k)).astype(MXU_DTYPE)
        y = jnp.dot(wc2_ref[...], mean_k, preferred_element_type=jnp.float32)
        y = y + jnp.dot(wsc_ref[...], xs_ref[0], preferred_element_type=jnp.float32)
        o_ref[0] = _leaky(y + bo_ref[...]).astype(o_ref.dtype)


def lpfa_conv2_shortcut(xyz8, nbr_xyz, x1_bf, nbr_feat, x_bf, prm, *, num_k, cap=1024):
    B, Cp, Np = xyz8.shape
    P = x1_bf.shape[1]
    Cin = x_bf.shape[1]
    Cout = prm["wc2"].shape[0]
    tn = _tile_of(Np, cap)
    nblk = Np // tn

    point_map = lambda b, j, k: (b, 0, j)
    nbr_map = lambda b, j, k: (b, 0, k * nblk + j)   # k-major columns: offset k*Np + j*tn
    full2 = lambda b, j, k: (0, 0)

    kernel = functools.partial(_lpfa_cic_kernel, num_k=num_k)
    return pl.pallas_call(
        kernel,
        out_shape=jax.ShapeDtypeStruct((B, Cout, Np), jnp.float32),
        grid=(B, nblk, num_k),
        in_specs=[
            pl.BlockSpec((1, Cp, tn), point_map),     # center xyz
            pl.BlockSpec((1, Cp, tn), nbr_map),       # neighbor xyz
            pl.BlockSpec((1, P, tn), point_map),      # center features (conv1 out)
            pl.BlockSpec((1, P, tn), nbr_map),        # neighbor features
            pl.BlockSpec((1, Cin, tn), point_map),    # shortcut input
            pl.BlockSpec((P, Cp), full2),             # w_ctr
            pl.BlockSpec((P, Cp), full2),             # w_nbr
            pl.BlockSpec((P, 1), full2),              # b9
            pl.BlockSpec((P, P), full2),              # mlp1 w
            pl.BlockSpec((P, 1), full2),              # mlp1 b
            pl.BlockSpec((P, P), full2),              # mlp2 w
            pl.BlockSpec((P, 1), full2),              # mlp2 b
            pl.BlockSpec((Cout, P), full2),           # conv2 w
            pl.BlockSpec((Cout, Cin), full2),         # shortcut w
            pl.BlockSpec((Cout, 1), full2),           # combined shift
        ],
        out_specs=pl.BlockSpec((1, Cout, tn), point_map),
        scratch_shapes=[pltpu.VMEM((P, tn), jnp.float32),   # h_ctr
                        pltpu.VMEM((P, tn), jnp.float32)],  # k-accumulator
        compiler_params=pltpu.CompilerParams(
            dimension_semantics=("parallel", "parallel", "arbitrary")),
    )(xyz8, nbr_xyz, x1_bf, nbr_feat, x_bf,
      prm["wctr"], prm["wnbr"], prm["b9"],
      prm["w1"], prm["b1"], prm["w2"], prm["b2"],
      prm["wc2"], prm["wsc"], prm["bout"])


# ---------------------------------------------------------------------------
# Parameter init (torch orientation [Cout, Cin]; BN folded to scale/shift)
# ---------------------------------------------------------------------------
def init_params(key, in_channels, out_channels, bottleneck_ratio=2):
    planes = in_channels // bottleneck_ratio
    ks = jax.random.split(key, 12)

    def conv_w(k_, cout, cin):
        return jax.random.normal(k_, (cout, cin), jnp.float32) / jnp.sqrt(float(cin))

    def bn(k_, c):
        k1, k2, k3, k4 = jax.random.split(k_, 4)
        gamma = jax.random.uniform(k1, (c,), jnp.float32, 0.5, 1.5)
        beta = 0.1 * jax.random.normal(k2, (c,), jnp.float32)
        mean = 0.1 * jax.random.normal(k3, (c,), jnp.float32)
        var = jax.random.uniform(k4, (c,), jnp.float32, 0.5, 1.5)
        scale = gamma / jnp.sqrt(var + BN_EPS)
        return scale, beta - mean * scale

    p = {}
    p["conv1_w"] = conv_w(ks[0], planes, in_channels)
    p["conv1_s"], p["conv1_b"] = bn(ks[1], planes)
    p["conv2_w"] = conv_w(ks[2], out_channels, planes)
    p["conv2_s"], p["conv2_b"] = bn(ks[3], out_channels)
    p["sc_w"] = conv_w(ks[4], out_channels, in_channels)
    p["sc_s"], p["sc_b"] = bn(ks[5], out_channels)
    p["xyz2f_w"] = conv_w(ks[6], planes, 9)
    p["xyz2f_s"], p["xyz2f_b"] = bn(ks[7], planes)
    p["mlp1_w"] = conv_w(ks[8], planes, planes)
    p["mlp1_s"], p["mlp1_b"] = bn(ks[9], planes)
    p["mlp2_w"] = conv_w(ks[10], planes, planes)
    p["mlp2_s"], p["mlp2_b"] = bn(ks[11], planes)
    return p


# ---------------------------------------------------------------------------
# Forward (CIC.forward with npoint == N, curve_config=None, Cin != Cout)
# ---------------------------------------------------------------------------
def _cic_forward_impl(xyz, x, params, *, k):
    B, Cin, N = x.shape

    Np = _round_up(N, LANE)
    pad = Np - N
    xyz_p = jnp.pad(xyz.astype(jnp.float32), ((0, 0), (0, 0), (0, pad)))
    x_bf = jnp.pad(x, ((0, 0), (0, 0), (0, pad))).astype(MXU_DTYPE)

    # conv1: Conv1d + BN + LeakyReLU (lane-dense bf16 output)
    x1_bf = conv1_bn_leaky(x_bf, params["conv1_w"], params["conv1_s"], params["conv1_b"])

    # knn(xyz, k): top-(k+1) of negative squared pairwise distances; the reference
    # LPFA consumes idx[:, :, :k] (self included), mirrored here.  f32 distances keep
    # the same neighbor selection as the PyTorch reference.
    xyz8 = jnp.pad(xyz_p, ((0, 0), (0, COORD_PAD - 3), (0, 0)))     # [B, 8, Np]
    xyz8_t = jnp.transpose(xyz8, (0, 2, 1))                         # [B, Np, 8]
    pd = pairwise_neg_sqdist(xyz8, xyz8_t)[:, :N, :N]
    _, idx_full = jax.lax.top_k(pd, k + 1)                          # [B, N, k+1]
    idx = idx_full[:, :, :k]                                        # [B, N, k]

    # k-major flattened neighbor index, padded along points to Np (padded entries
    # gather point 0; their output columns are sliced off below).
    idx_km = jnp.transpose(idx, (0, 2, 1))                          # [B, k, N]
    idx_km = jnp.pad(idx_km, ((0, 0), (0, 0), (0, pad))).reshape(B, k * Np)

    # neighbor gathers (contiguous-row gather, then one transpose to lane-dense)
    nbr_xyz = jnp.take_along_axis(xyz8_t, idx_km[..., None], axis=1)       # [B, k*Np, 8]
    nbr_xyz = jnp.transpose(nbr_xyz, (0, 2, 1))                            # [B, 8, k*Np]
    x1_t = jnp.transpose(x1_bf, (0, 2, 1))                                 # [B, Np, P]
    nbr_feat = jnp.take_along_axis(x1_t, idx_km[..., None], axis=1)        # [B, k*Np, P]
    nbr_feat = jnp.transpose(nbr_feat, (0, 2, 1))                          # [B, P, k*Np]

    # fold BN scales / xyz2feature 9-channel split into the weights
    w9 = _fold_rows(params["xyz2f_w"], params["xyz2f_s"])                  # [P, 9]
    prm = dict(
        wctr=jnp.pad(w9[:, 0:3] - w9[:, 6:9], ((0, 0), (0, COORD_PAD - 3))),
        wnbr=jnp.pad(w9[:, 3:6] + w9[:, 6:9], ((0, 0), (0, COORD_PAD - 3))),
        b9=_col(params["xyz2f_b"]),
        w1=_fold_rows(params["mlp1_w"], params["mlp1_s"]).astype(MXU_DTYPE),
        b1=_col(params["mlp1_b"]),
        w2=_fold_rows(params["mlp2_w"], params["mlp2_s"]).astype(MXU_DTYPE),
        b2=_col(params["mlp2_b"]),
        wc2=_fold_rows(params["conv2_w"], params["conv2_s"]).astype(MXU_DTYPE),
        wsc=_fold_rows(params["sc_w"], params["sc_s"]).astype(MXU_DTYPE),
        bout=_col(params["conv2_b"] + params["sc_b"]),
    )

    # fused LPFA + mean-over-k + conv2 + shortcut + residual + LeakyReLU
    out_p = lpfa_conv2_shortcut(xyz8, nbr_xyz, x1_bf, nbr_feat, x_bf, prm, num_k=k)
    return xyz, out_p[:, :, :N]


cic_forward = jax.jit(_cic_forward_impl, static_argnames="k")


if __name__ == "__main__":
    B, N, K = 2, 16, 8
    in_channels, out_channels = 16, 32        # planes = 8 (bottleneck_ratio=2)

    key = jax.random.PRNGKey(0)
    kxyz, kx, kp = jax.random.split(key, 3)
    xyz = jax.random.normal(kxyz, (B, 3, N), jnp.float32)
    x = jax.random.normal(kx, (B, in_channels, N), jnp.float32)
    params = init_params(kp, in_channels, out_channels)

    xyz_out, x_out = cic_forward(xyz, x, params, k=K)
    jax.block_until_ready(x_out)

    assert xyz_out.shape == (B, 3, N)
    assert x_out.shape == (B, out_channels, N)
    assert bool(jnp.all(jnp.isfinite(x_out)))
    print("KERNEL_OK")
</pallas_src>

<mosaic_0001>
module attributes {stable_mosaic.version = 11 : i64} {
  func.func @_pdist_kernel(%arg0: i32, %arg1: i32, %arg2: i32, %arg3: memref<1x128x8xf32, #tpu.memory_space<vmem>>, %arg4: memref<1x8x128xf32, #tpu.memory_space<vmem>>, %arg5: memref<1x128x128xf32, #tpu.memory_space<vmem>>) attributes {dimension_semantics = [#tpu.dimension_semantics<parallel>, #tpu.dimension_semantics<parallel>, #tpu.dimension_semantics<parallel>], iteration_bounds = array<i64: 2, 1, 1>, scalar_prefetch = 0 : i64, scratch_operands = 0 : i64, tpu.core_type = #tpu.core_type<tc>, window_params = [{transform_indices = @transform_0, window_bounds = array<i64: 1, 128, 8>}, {transform_indices = @transform_1, window_bounds = array<i64: 1, 8, 128>}, {transform_indices = @transform_2, window_bounds = array<i64: 1, 128, 128>}]} {
    %c0 = arith.constant 0 : index
    %c0_0 = arith.constant 0 : index
    %c0_1 = arith.constant 0 : index
    %0 = vector.load %arg3[%c0, %c0_0, %c0_1] : memref<1x128x8xf32, #tpu.memory_space<vmem>>, vector<1x128x8xf32>
    %1 = vector.shape_cast %0 : vector<1x128x8xf32> to vector<128x8xf32>
    %c0_2 = arith.constant 0 : index
    %c0_3 = arith.constant 0 : index
    %c0_4 = arith.constant 0 : index
    %2 = vector.load %arg4[%c0_2, %c0_3, %c0_4] : memref<1x8x128xf32, #tpu.memory_space<vmem>>, vector<1x8x128xf32>
    %3 = vector.shape_cast %2 : vector<1x8x128xf32> to vector<8x128xf32>
    %cst = arith.constant dense<0.000000e+00> : vector<128x128xf32>
    %4 = tpu.matmul %1, %3, %cst {dimension_numbers = #tpu.dot_dimension_numbers<[1], [0], [0], [1], [0, 0, 1, 1], [], []>} : vector<128x8xf32>, vector<8x128xf32>, vector<128x128xf32> -> vector<128x128xf32>
    %5 = arith.mulf %1, %1 : vector<128x8xf32>
    %cst_5 = arith.constant dense<0.000000e+00> : vector<128xf32>
    %6 = vector.multi_reduction <add>, %5, %cst_5 [1] : vector<128x8xf32> to vector<128xf32>
    %7 = vector.shape_cast %6 : vector<128xf32> to vector<128x1xf32>
    %8 = arith.mulf %3, %3 : vector<8x128xf32>
    %cst_6 = arith.constant dense<0.000000e+00> : vector<128xf32>
    %9 = vector.multi_reduction <add>, %8, %cst_6 [0] : vector<8x128xf32> to vector<128xf32>
    %10 = vector.shape_cast %9 : vector<128xf32> to vector<1x128xf32>
    %cst_7 = arith.constant 2.000000e+00 : f32
    %11 = vector.broadcast %cst_7 : f32 to vector<128x128xf32>
    %12 = arith.mulf %11, %4 : vector<128x128xf32>
    %13 = vector.broadcast %7 : vector<128x1xf32> to vector<128x128xf32>
    %14 = arith.subf %12, %13 : vector<128x128xf32>
    %15 = vector.broadcast %10 : vector<1x128xf32> to vector<128x128xf32>
    %16 = arith.subf %14, %15 : vector<128x128xf32>
    %c0_8 = arith.constant 0 : index
    %c0_9 = arith.constant 0 : index
    %c0_10 = arith.constant 0 : index
    %17 = vector.load %arg5[%c0_8, %c0_9, %c0_10] : memref<1x128x128xf32, #tpu.memory_space<vmem>>, vector<1x128x128xf32>
    %18 = vector.shape_cast %17 : vector<1x128x128xf32> to vector<128x128xf32>
    %19 = vector.shape_cast %16 : vector<128x128xf32> to vector<1x128x128xf32>
    tpu.vector_store %arg5[%c0_8, %c0_9, %c0_10], %19 {strides = array<i32>} : memref<1x128x128xf32, #tpu.memory_space<vmem>>, vector<1x128x128xf32>,
    return
  }
  func.func @transform_0(%arg0: i32, %arg1: i32, %arg2: i32) -> (i32, i32, i32) {
    %c0_i32 = arith.constant 0 : i32
    %c0_i32_0 = arith.constant 0 : i32
    return %arg0, %arg1, %c0_i32 : i32, i32, i32
  }
  func.func @transform_1(%arg0: i32, %arg1: i32, %arg2: i32) -> (i32, i32, i32) {
    %c0_i32 = arith.constant 0 : i32
    %c0_i32_0 = arith.constant 0 : i32
    return %arg0, %c0_i32, %arg2 : i32, i32, i32
  }
  func.func @transform_2(%arg0: i32, %arg1: i32, %arg2: i32) -> (i32, i32, i32) {
    %c0_i32 = arith.constant 0 : i32
    return %arg0, %arg1, %arg2 : i32, i32, i32
  }
}

module attributes {stable_mosaic.version = 11 : i64} {
  func.func @_conv1_kernel(%arg0: i32, %arg1: i32, %arg2: memref<1x16x128xbf16, #tpu.memory_space<vmem>>, %arg3: memref<8x16xbf16, #tpu.memory_space<vmem>>, %arg4: memref<8x1xf32, #tpu.memory_space<vmem>>, %arg5: memref<1x8x128xbf16, #tpu.memory_space<vmem>>) attributes {dimension_semantics = [#tpu.dimension_semantics<parallel>, #tpu.dimension_semantics<parallel>], iteration_bounds = array<i64: 2, 1>, scalar_prefetch = 0 : i64, scratch_operands = 0 : i64, tpu.core_type = #tpu.core_type<tc>, window_params = [{transform_indices = @transform_0, window_bounds = array<i64: 1, 16, 128>}, {pipeline_mode = #tpu.pipeline_mode<synchronous>, transform_indices = @transform_1, window_bounds = array<i64: 8, 16>}, {pipeline_mode = #tpu.pipeline_mode<synchronous>, transform_indices = @transform_2, window_bounds = array<i64: 8, 1>}, {transform_indices = @transform_3, window_bounds = array<i64: 1, 8, 128>}]} {
    %c0 = arith.constant 0 : index
    %c0_0 = arith.constant 0 : index
    %0 = vector.load %arg3[%c0, %c0_0] : memref<8x16xbf16, #tpu.memory_space<vmem>>, vector<8x16xbf16>
    %c0_1 = arith.constant 0 : index
    %c0_2 = arith.constant 0 : index
    %c0_3 = arith.constant 0 : index
    %1 = vector.load %arg2[%c0_1, %c0_2, %c0_3] : memref<1x16x128xbf16, #tpu.memory_space<vmem>>, vector<1x16x128xbf16>
    %2 = vector.shape_cast %1 : vector<1x16x128xbf16> to vector<16x128xbf16>
    %cst = arith.constant dense<0.000000e+00> : vector<8x128xf32>
    %3 = tpu.matmul %0, %2, %cst {dimension_numbers = #tpu.dot_dimension_numbers<[1], [0], [0], [1], [0, 0, 1, 1], [], []>} : vector<8x16xbf16>, vector<16x128xbf16>, vector<8x128xf32> -> vector<8x128xf32>
    %c0_4 = arith.constant 0 : index
    %c0_5 = arith.constant 0 : index
    %4 = vector.load %arg4[%c0_4, %c0_5] : memref<8x1xf32, #tpu.memory_space<vmem>>, vector<8x1xf32>
    %5 = vector.broadcast %4 : vector<8x1xf32> to vector<8x128xf32>
    %6 = arith.addf %3, %5 : vector<8x128xf32>
    %cst_6 = arith.constant 0.000000e+00 : f32
    %7 = vector.broadcast %cst_6 : f32 to vector<8x128xf32>
    %8 = arith.cmpf oge, %6, %7 : vector<8x128xf32>
    %cst_7 = arith.constant 2.000000e-01 : f32
    %9 = vector.broadcast %cst_7 : f32 to vector<8x128xf32>
    %10 = arith.mulf %9, %6 : vector<8x128xf32>
    %11 = arith.select %8, %6, %10 : vector<8x128xi1>, vector<8x128xf32>
    %12 = arith.truncf %11 : vector<8x128xf32> to vector<8x128xbf16>
    %c0_8 = arith.constant 0 : index
    %c0_9 = arith.constant 0 : index
    %c0_10 = arith.constant 0 : index
    %13 = vector.load %arg5[%c0_8, %c0_9, %c0_10] : memref<1x8x128xbf16, #tpu.memory_space<vmem>>, vector<1x8x128xbf16>
    %14 = vector.shape_cast %13 : vector<1x8x128xbf16> to vector<8x128xbf16>
    %15 = vector.shape_cast %12 : vector<8x128xbf16> to vector<1x8x128xbf16>
    tpu.vector_store %arg5[%c0_8, %c0_9, %c0_10], %15 {strides = array<i32>} : memref<1x8x128xbf16, #tpu.memory_space<vmem>>, vector<1x8x128xbf16>,
    return
  }
  func.func @transform_0(%arg0: i32, %arg1: i32) -> (i32, i32, i32) {
    %c0_i32 = arith.constant 0 : i32
    %c0_i32_0 = arith.constant 0 : i32
    return %arg0, %c0_i32, %arg1 : i32, i32, i32
  }
  func.func @transform_1(%arg0: i32, %arg1: i32) -> (i32, i32) {
    %c0_i32 = arith.constant 0 : i32
    %c0_i32_0 = arith.constant 0 : i32
    %c0_i32_1 = arith.constant 0 : i32
    return %c0_i32, %c0_i32_0 : i32, i32
  }
  func.func @transform_2(%arg0: i32, %arg1: i32) -> (i32, i32) {
    %c0_i32 = arith.constant 0 : i32
    %c0_i32_0 = arith.constant 0 : i32
    %c0_i32_1 = arith.constant 0 : i32
    return %c0_i32, %c0_i32_0 : i32, i32
  }
  func.func @transform_3(%arg0: i32, %arg1: i32) -> (i32, i32, i32) {
    %c0_i32 = arith.constant 0 : i32
    %c0_i32_0 = arith.constant 0 : i32
    return %arg0, %c0_i32, %arg1 : i32, i32, i32
  }
}

module attributes {stable_mosaic.version = 11 : i64} {
  func.func @_lpfa_cic_kernel(%arg0: i32, %arg1: i32, %arg2: i32, %arg3: memref<1x8x128xf32, #tpu.memory_space<vmem>>, %arg4: memref<1x8x128xf32, #tpu.memory_space<vmem>>, %arg5: memref<1x8x128xbf16, #tpu.memory_space<vmem>>, %arg6: memref<1x8x128xbf16, #tpu.memory_space<vmem>>, %arg7: memref<1x16x128xbf16, #tpu.memory_space<vmem>>, %arg8: memref<8x8xf32, #tpu.memory_space<vmem>>, %arg9: memref<8x8xf32, #tpu.memory_space<vmem>>, %arg10: memref<8x1xf32, #tpu.memory_space<vmem>>, %arg11: memref<8x8xbf16, #tpu.memory_space<vmem>>, %arg12: memref<8x1xf32, #tpu.memory_space<vmem>>, %arg13: memref<8x8xbf16, #tpu.memory_space<vmem>>, %arg14: memref<8x1xf32, #tpu.memory_space<vmem>>, %arg15: memref<32x8xbf16, #tpu.memory_space<vmem>>, %arg16: memref<32x16xbf16, #tpu.memory_space<vmem>>, %arg17: memref<32x1xf32, #tpu.memory_space<vmem>>, %arg18: memref<1x32x128xf32, #tpu.memory_space<vmem>>, %arg19: memref<8x128xf32, #tpu.memory_space<vmem>>, %arg20: memref<8x128xf32, #tpu.memory_space<vmem>>) attributes {dimension_semantics = [#tpu.dimension_semantics<parallel>, #tpu.dimension_semantics<parallel>, #tpu.dimension_semantics<arbitrary>], iteration_bounds = array<i64: 2, 1, 8>, scalar_prefetch = 0 : i64, scratch_operands = 2 : i64, tpu.core_type = #tpu.core_type<tc>, window_params = [{transform_indices = @transform_0, window_bounds = array<i64: 1, 8, 128>}, {transform_indices = @transform_1, window_bounds = array<i64: 1, 8, 128>}, {transform_indices = @transform_2, window_bounds = array<i64: 1, 8, 128>}, {transform_indices = @transform_3, window_bounds = array<i64: 1, 8, 128>}, {transform_indices = @transform_4, window_bounds = array<i64: 1, 16, 128>}, {pipeline_mode = #tpu.pipeline_mode<synchronous>, transform_indices = @transform_5, window_bounds = array<i64: 8, 8>}, {pipeline_mode = #tpu.pipeline_mode<synchronous>, transform_indices = @transform_6, window_bounds = array<i64: 8, 8>}, {pipeline_mode = #tpu.pipeline_mode<synchronous>, transform_indices = @transform_7, window_bounds = array<i64: 8, 1>}, {pipeline_mode = #tpu.pipeline_mode<synchronous>, transform_indices = @transform_8, window_bounds = array<i64: 8, 8>}, {pipeline_mode = #tpu.pipeline_mode<synchronous>, transform_indices = @transform_9, window_bounds = array<i64: 8, 1>}, {pipeline_mode = #tpu.pipeline_mode<synchronous>, transform_indices = @transform_10, window_bounds = array<i64: 8, 8>}, {pipeline_mode = #tpu.pipeline_mode<synchronous>, transform_indices = @transform_11, window_bounds = array<i64: 8, 1>}, {pipeline_mode = #tpu.pipeline_mode<synchronous>, transform_indices = @transform_12, window_bounds = array<i64: 32, 8>}, {pipeline_mode = #tpu.pipeline_mode<synchronous>, transform_indices = @transform_13, window_bounds = array<i64: 32, 16>}, {pipeline_mode = #tpu.pipeline_mode<synchronous>, transform_indices = @transform_14, window_bounds = array<i64: 32, 1>}, {transform_indices = @transform_15, window_bounds = array<i64: 1, 32, 128>}]} {
    %c0_i32 = arith.constant 0 : i32
    %0 = arith.cmpi eq, %arg2, %c0_i32 : i32
    %1 = arith.extui %0 : i1 to i32
    %c0_i32_0 = arith.constant 0 : i32
    %2 = arith.cmpi ne, %1, %c0_i32_0 : i32
    scf.if %2 {
      %c0_34 = arith.constant 0 : index
      %c0_35 = arith.constant 0 : index
      %50 = vector.load %arg8[%c0_34, %c0_35] : memref<8x8xf32, #tpu.memory_space<vmem>>, vector<8x8xf32>
      %c0_36 = arith.constant 0 : index
      %c0_37 = arith.constant 0 : index
      %c0_38 = arith.constant 0 : index
      %51 = vector.load %arg3[%c0_36, %c0_37, %c0_38] : memref<1x8x128xf32, #tpu.memory_space<vmem>>, vector<1x8x128xf32>
      %52 = vector.shape_cast %51 : vector<1x8x128xf32> to vector<8x128xf32>
      %cst_39 = arith.constant dense<0.000000e+00> : vector<8x128xf32>
      %53 = tpu.matmul %50, %52, %cst_39 {dimension_numbers = #tpu.dot_dimension_numbers<[1], [0], [0], [1], [0, 0, 1, 1], [], []>} : vector<8x8xf32>, vector<8x128xf32>, vector<8x128xf32> -> vector<8x128xf32>
      %c0_40 = arith.constant 0 : index
      %c0_41 = arith.constant 0 : index
      %54 = vector.load %arg10[%c0_40, %c0_41] : memref<8x1xf32, #tpu.memory_space<vmem>>, vector<8x1xf32>
      %55 = vector.broadcast %54 : vector<8x1xf32> to vector<8x128xf32>
      %56 = arith.addf %53, %55 : vector<8x128xf32>
      %c0_42 = arith.constant 0 : index
      %c0_43 = arith.constant 0 : index
      %57 = vector.load %arg19[%c0_42, %c0_43] : memref<8x128xf32, #tpu.memory_space<vmem>>, vector<8x128xf32>
      tpu.vector_store %arg19[%c0_42, %c0_43], %56 {strides = array<i32>} : memref<8x128xf32, #tpu.memory_space<vmem>>, vector<8x128xf32>,
      %cst_44 = arith.constant 0.000000e+00 : f32
      %58 = vector.broadcast %cst_44 : f32 to vector<8x128xf32>
      %c0_45 = arith.constant 0 : index
      %c0_46 = arith.constant 0 : index
      %59 = vector.load %arg20[%c0_45, %c0_46] : memref<8x128xf32, #tpu.memory_space<vmem>>, vector<8x128xf32>
      tpu.vector_store %arg20[%c0_45, %c0_46], %58 {strides = array<i32>} : memref<8x128xf32, #tpu.memory_space<vmem>>, vector<8x128xf32>,
    } else {
    }
    %c0 = arith.constant 0 : index
    %c0_1 = arith.constant 0 : index
    %3 = vector.load %arg19[%c0, %c0_1] : memref<8x128xf32, #tpu.memory_space<vmem>>, vector<8x128xf32>
    %c0_2 = arith.constant 0 : index
    %c0_3 = arith.constant 0 : index
    %4 = vector.load %arg9[%c0_2, %c0_3] : memref<8x8xf32, #tpu.memory_space<vmem>>, vector<8x8xf32>
    %c0_4 = arith.constant 0 : index
    %c0_5 = arith.constant 0 : index
    %c0_6 = arith.constant 0 : index
    %5 = vector.load %arg4[%c0_4, %c0_5, %c0_6] : memref<1x8x128xf32, #tpu.memory_space<vmem>>, vector<1x8x128xf32>
    %6 = vector.shape_cast %5 : vector<1x8x128xf32> to vector<8x128xf32>
    %cst = arith.constant dense<0.000000e+00> : vector<8x128xf32>
    %7 = tpu.matmul %4, %6, %cst {dimension_numbers = #tpu.dot_dimension_numbers<[1], [0], [0], [1], [0, 0, 1, 1], [], []>} : vector<8x8xf32>, vector<8x128xf32>, vector<8x128xf32> -> vector<8x128xf32>
    %8 = arith.addf %3, %7 : vector<8x128xf32>
    %c0_7 = arith.constant 0 : index
    %c0_8 = arith.constant 0 : index
    %c0_9 = arith.constant 0 : index
    %9 = vector.load %arg6[%c0_7, %c0_8, %c0_9] : memref<1x8x128xbf16, #tpu.memory_space<vmem>>, vector<1x8x128xbf16>
    %10 = vector.shape_cast %9 : vector<1x8x128xbf16> to vector<8x128xbf16>
    %11 = arith.extf %10 : vector<8x128xbf16> to vector<8x128xf32>
    %c0_10 = arith.constant 0 : index
    %c0_11 = arith.constant 0 : index
    %c0_12 = arith.constant 0 : index
    %12 = vector.load %arg5[%c0_10, %c0_11, %c0_12] : memref<1x8x128xbf16, #tpu.memory_space<vmem>>, vector<1x8x128xbf16>
    %13 = vector.shape_cast %12 : vector<1x8x128xbf16> to vector<8x128xbf16>
    %14 = arith.extf %13 : vector<8x128xbf16> to vector<8x128xf32>
    %15 = arith.subf %11, %14 : vector<8x128xf32>
    %16 = arith.addf %15, %8 : vector<8x128xf32>
    %cst_13 = arith.constant 0.000000e+00 : f32
    %17 = vector.broadcast %cst_13 : f32 to vector<8x128xf32>
    %18 = arith.cmpf oge, %16, %17 : vector<8x128xf32>
    %cst_14 = arith.constant 2.000000e-01 : f32
    %19 = vector.broadcast %cst_14 : f32 to vector<8x128xf32>
    %20 = arith.mulf %19, %16 : vector<8x128xf32>
    %21 = arith.select %18, %16, %20 : vector<8x128xi1>, vector<8x128xf32>
    %c0_15 = arith.constant 0 : index
    %c0_16 = arith.constant 0 : index
    %22 = vector.load %arg11[%c0_15, %c0_16] : memref<8x8xbf16, #tpu.memory_space<vmem>>, vector<8x8xbf16>
    %23 = arith.truncf %21 : vector<8x128xf32> to vector<8x128xbf16>
    %cst_17 = arith.constant dense<0.000000e+00> : vector<8x128xf32>
    %24 = tpu.matmul %22, %23, %cst_17 {dimension_numbers = #tpu.dot_dimension_numbers<[1], [0], [0], [1], [0, 0, 1, 1], [], []>} : vector<8x8xbf16>, vector<8x128xbf16>, vector<8x128xf32> -> vector<8x128xf32>
    %c0_18 = arith.constant 0 : index
    %c0_19 = arith.constant 0 : index
    %25 = vector.load %arg12[%c0_18, %c0_19] : memref<8x1xf32, #tpu.memory_space<vmem>>, vector<8x1xf32>
    %26 = vector.broadcast %25 : vector<8x1xf32> to vector<8x128xf32>
    %27 = arith.addf %24, %26 : vector<8x128xf32>
    %cst_20 = arith.constant 0.000000e+00 : f32
    %28 = vector.broadcast %cst_20 : f32 to vector<8x128xf32>
    %29 = arith.cmpf oge, %27, %28 : vector<8x128xf32>
    %cst_21 = arith.constant 2.000000e-01 : f32
    %30 = vector.broadcast %cst_21 : f32 to vector<8x128xf32>
    %31 = arith.mulf %30, %27 : vector<8x128xf32>
    %32 = arith.select %29, %27, %31 : vector<8x128xi1>, vector<8x128xf32>
    %c0_22 = arith.constant 0 : index
    %c0_23 = arith.constant 0 : index
    %33 = vector.load %arg13[%c0_22, %c0_23] : memref<8x8xbf16, #tpu.memory_space<vmem>>, vector<8x8xbf16>
    %34 = arith.truncf %32 : vector<8x128xf32> to vector<8x128xbf16>
    %cst_24 = arith.constant dense<0.000000e+00> : vector<8x128xf32>
    %35 = tpu.matmul %33, %34, %cst_24 {dimension_numbers = #tpu.dot_dimension_numbers<[1], [0], [0], [1], [0, 0, 1, 1], [], []>} : vector<8x8xbf16>, vector<8x128xbf16>, vector<8x128xf32> -> vector<8x128xf32>
    %c0_25 = arith.constant 0 : index
    %c0_26 = arith.constant 0 : index
    %36 = vector.load %arg14[%c0_25, %c0_26] : memref<8x1xf32, #tpu.memory_space<vmem>>, vector<8x1xf32>
    %37 = vector.broadcast %36 : vector<8x1xf32> to vector<8x128xf32>
    %38 = arith.addf %35, %37 : vector<8x128xf32>
    %cst_27 = arith.constant 0.000000e+00 : f32
    %39 = vector.broadcast %cst_27 : f32 to vector<8x128xf32>
    %40 = arith.cmpf oge, %38, %39 : vector<8x128xf32>
    %cst_28 = arith.constant 2.000000e-01 : f32
    %41 = vector.broadcast %cst_28 : f32 to vector<8x128xf32>
    %42 = arith.mulf %41, %38 : vector<8x128xf32>
    %43 = arith.select %40, %38, %42 : vector<8x128xi1>, vector<8x128xf32>
    %c0_29 = arith.constant 0 : index
    %c0_30 = arith.constant 0 : index
    %44 = vector.load %arg20[%c0_29, %c0_30] : memref<8x128xf32, #tpu.memory_space<vmem>>, vector<8x128xf32>
    %45 = arith.addf %44, %43 : vector<8x128xf32>
    %c0_31 = arith.constant 0 : index
    %c0_32 = arith.constant 0 : index
    %46 = vector.load %arg20[%c0_31, %c0_32] : memref<8x128xf32, #tpu.memory_space<vmem>>, vector<8x128xf32>
    tpu.vector_store %arg20[%c0_31, %c0_32], %45 {strides = array<i32>} : memref<8x128xf32, #tpu.memory_space<vmem>>, vector<8x128xf32>,
    %c7_i32 = arith.constant 7 : i32
    %47 = arith.cmpi eq, %arg2, %c7_i32 : i32
    %48 = arith.extui %47 : i1 to i32
    %c0_i32_33 = arith.constant 0 : i32
    %49 = arith.cmpi ne, %48, %c0_i32_33 : i32
    scf.if %49 {
      %c0_34 = arith.constant 0 : index
      %c0_35 = arith.constant 0 : index
      %50 = vector.load %arg20[%c0_34, %c0_35] : memref<8x128xf32, #tpu.memory_space<vmem>>, vector<8x128xf32>
      %cst_36 = arith.constant 1.250000e-01 : f32
      %51 = vector.broadcast %cst_36 : f32 to vector<8x128xf32>
      %52 = arith.mulf %50, %51 : vector<8x128xf32>
      %53 = arith.truncf %52 : vector<8x128xf32> to vector<8x128xbf16>
      %c0_37 = arith.constant 0 : index
      %c0_38 = arith.constant 0 : index
      %54 = vector.load %arg15[%c0_37, %c0_38] : memref<32x8xbf16, #tpu.memory_space<vmem>>, vector<32x8xbf16>
      %cst_39 = arith.constant dense<0.000000e+00> : vector<32x128xf32>
      %55 = tpu.matmul %54, %53, %cst_39 {dimension_numbers = #tpu.dot_dimension_numbers<[1], [0], [0], [1], [0, 0, 1, 1], [], []>} : vector<32x8xbf16>, vector<8x128xbf16>, vector<32x128xf32> -> vector<32x128xf32>
      %c0_40 = arith.constant 0 : index
      %c0_41 = arith.constant 0 : index
      %56 = vector.load %arg16[%c0_40, %c0_41] : memref<32x16xbf16, #tpu.memory_space<vmem>>, vector<32x16xbf16>
      %c0_42 = arith.constant 0 : index
      %c0_43 = arith.constant 0 : index
      %c0_44 = arith.constant 0 : index
      %57 = vector.load %arg7[%c0_42, %c0_43, %c0_44] : memref<1x16x128xbf16, #tpu.memory_space<vmem>>, vector<1x16x128xbf16>
      %58 = vector.shape_cast %57 : vector<1x16x128xbf16> to vector<16x128xbf16>
      %cst_45 = arith.constant dense<0.000000e+00> : vector<32x128xf32>
      %59 = tpu.matmul %56, %58, %cst_45 {dimension_numbers = #tpu.dot_dimension_numbers<[1], [0], [0], [1], [0, 0, 1, 1], [], []>} : vector<32x16xbf16>, vector<16x128xbf16>, vector<32x128xf32> -> vector<32x128xf32>
      %60 = arith.addf %55, %59 : vector<32x128xf32>
      %c0_46 = arith.constant 0 : index
      %c0_47 = arith.constant 0 : index
      %61 = vector.load %arg17[%c0_46, %c0_47] : memref<32x1xf32, #tpu.memory_space<vmem>>, vector<32x1xf32>
      %62 = vector.broadcast %61 : vector<32x1xf32> to vector<32x128xf32>
      %63 = arith.addf %60, %62 : vector<32x128xf32>
      %cst_48 = arith.constant 0.000000e+00 : f32
      %64 = vector.broadcast %cst_48 : f32 to vector<32x128xf32>
      %65 = arith.cmpf oge, %63, %64 : vector<32x128xf32>
      %cst_49 = arith.constant 2.000000e-01 : f32
      %66 = vector.broadcast %cst_49 : f32 to vector<32x128xf32>
      %67 = arith.mulf %66, %63 : vector<32x128xf32>
      %68 = arith.select %65, %63, %67 : vector<32x128xi1>, vector<32x128xf32>
      %c0_50 = arith.constant 0 : index
      %c0_51 = arith.constant 0 : index
      %c0_52 = arith.constant 0 : index
      %69 = vector.load %arg18[%c0_50, %c0_51, %c0_52] : memref<1x32x128xf32, #tpu.memory_space<vmem>>, vector<1x32x128xf32>
      %70 = vector.shape_cast %69 : vector<1x32x128xf32> to vector<32x128xf32>
      %71 = vector.shape_cast %68 : vector<32x128xf32> to vector<1x32x128xf32>
      tpu.vector_store %arg18[%c0_50, %c0_51, %c0_52], %71 {strides = array<i32>} : memref<1x32x128xf32, #tpu.memory_space<vmem>>, vector<1x32x128xf32>,
    } else {
    }
    return
  }
  func.func @transform_0(%arg0: i32, %arg1: i32, %arg2: i32) -> (i32, i32, i32) {
    %c0_i32 = arith.constant 0 : i32
    %c0_i32_0 = arith.constant 0 : i32
    return %arg0, %c0_i32, %arg1 : i32, i32, i32
  }
  func.func @transform_1(%arg0: i32, %arg1: i32, %arg2: i32) -> (i32, i32, i32) {
    %c1_i32 = arith.constant 1 : i32
    %0 = arith.muli %arg2, %c1_i32 : i32
    %1 = arith.addi %0, %arg1 : i32
    %c0_i32 = arith.constant 0 : i32
    %c0_i32_0 = arith.constant 0 : i32
    return %arg0, %c0_i32, %1 : i32, i32, i32
  }
  func.func @transform_2(%arg0: i32, %arg1: i32, %arg2: i32) -> (i32, i32, i32) {
    %c0_i32 = arith.constant 0 : i32
    %c0_i32_0 = arith.constant 0 : i32
    return %arg0, %c0_i32, %arg1 : i32, i32, i32
  }
  func.func @transform_3(%arg0: i32, %arg1: i32, %arg2: i32) -> (i32, i32, i32) {
    %c1_i32 = arith.constant 1 : i32
    %0 = arith.muli %arg2, %c1_i32 : i32
    %1 = arith.addi %0, %arg1 : i32
    %c0_i32 = arith.constant 0 : i32
    %c0_i32_0 = arith.constant 0 : i32
    return %arg0, %c0_i32, %1 : i32, i32, i32
  }
  func.func @transform_4(%arg0: i32, %arg1: i32, %arg2: i32) -> (i32, i32, i32) {
    %c0_i32 = arith.constant 0 : i32
    %c0_i32_0 = arith.constant 0 : i32
    return %arg0, %c0_i32, %arg1 : i32, i32, i32
  }
  func.func @transform_5(%arg0: i32, %arg1: i32, %arg2: i32) -> (i32, i32) {
    %c0_i32 = arith.constant 0 : i32
    %c0_i32_0 = arith.constant 0 : i32
    %c0_i32_1 = arith.constant 0 : i32
    return %c0_i32, %c0_i32_0 : i32, i32
  }
  func.func @transform_6(%arg0: i32, %arg1: i32, %arg2: i32) -> (i32, i32) {
    %c0_i32 = arith.constant 0 : i32
    %c0_i32_0 = arith.constant 0 : i32
    %c0_i32_1 = arith.constant 0 : i32
    return %c0_i32, %c0_i32_0 : i32, i32
  }
  func.func @transform_7(%arg0: i32, %arg1: i32, %arg2: i32) -> (i32, i32) {
    %c0_i32 = arith.constant 0 : i32
    %c0_i32_0 = arith.constant 0 : i32
    %c0_i32_1 = arith.constant 0 : i32
    return %c0_i32, %c0_i32_0 : i32, i32
  }
  func.func @transform_8(%arg0: i32, %arg1: i32, %arg2: i32) -> (i32, i32) {
    %c0_i32 = arith.constant 0 : i32
    %c0_i32_0 = arith.constant 0 : i32
    %c0_i32_1 = arith.constant 0 : i32
    return %c0_i32, %c0_i32_0 : i32, i32
  }
  func.func @transform_9(%arg0: i32, %arg1: i32, %arg2: i32) -> (i32, i32) {
    %c0_i32 = arith.constant 0 : i32
    %c0_i32_0 = arith.constant 0 : i32
    %c0_i32_1 = arith.constant 0 : i32
    return %c0_i32, %c0_i32_0 : i32, i32
  }
  func.func @transform_10(%arg0: i32, %arg1: i32, %arg2: i32) -> (i32, i32) {
    %c0_i32 = arith.constant 0 : i32
    %c0_i32_0 = arith.constant 0 : i32
    %c0_i32_1 = arith.constant 0 : i32
    return %c0_i32, %c0_i32_0 : i32, i32
  }
  func.func @transform_11(%arg0: i32, %arg1: i32, %arg2: i32) -> (i32, i32) {
    %c0_i32 = arith.constant 0 : i32
    %c0_i32_0 = arith.constant 0 : i32
    %c0_i32_1 = arith.constant 0 : i32
    return %c0_i32, %c0_i32_0 : i32, i32
  }
  func.func @transform_12(%arg0: i32, %arg1: i32, %arg2: i32) -> (i32, i32) {
    %c0_i32 = arith.constant 0 : i32
    %c0_i32_0 = arith.constant 0 : i32
    %c0_i32_1 = arith.constant 0 : i32
    return %c0_i32, %c0_i32_0 : i32, i32
  }
  func.func @transform_13(%arg0: i32, %arg1: i32, %arg2: i32) -> (i32, i32) {
    %c0_i32 = arith.constant 0 : i32
    %c0_i32_0 = arith.constant 0 : i32
    %c0_i32_1 = arith.constant 0 : i32
    return %c0_i32, %c0_i32_0 : i32, i32
  }
  func.func @transform_14(%arg0: i32, %arg1: i32, %arg2: i32) -> (i32, i32) {
    %c0_i32 = arith.constant 0 : i32
    %c0_i32_0 = arith.constant 0 : i32
    %c0_i32_1 = arith.constant 0 : i32
    return %c0_i32, %c0_i32_0 : i32, i32
  }
  func.func @transform_15(%arg0: i32, %arg1: i32, %arg2: i32) -> (i32, i32, i32) {
    %c0_i32 = arith.constant 0 : i32
    %c0_i32_0 = arith.constant 0 : i32
    return %arg0, %c0_i32, %arg1 : i32, i32, i32
  }
}

</mosaic_0001>

<llo_original>
// kernel: _cic_forward_impl.4
$region0: #{_cic_forward_impl.4}
  #allocation0 [shape = 'u32[]', space=smem, size = 0x4, offset = 0x4, fixed_abs, tag = 'smem constant byte address 0x4 - core index']
  #allocation1 [shape = 'u32[144,128]{1,0:T(1,128)}', space=vmem, size = 0x12000, scoped, tag = 'internal scratch']
  %s0 = inlined_call_operand.vmem [shape: f32[2,128,8], index: 0, kind: input, shape index: {}]
  %s1 = inlined_call_operand.vmem [shape: f32[2,8,128], index: 1, kind: input, shape index: {}]
  %s2 = inlined_call_operand.vmem [shape: f32[2,128,128], index: 2, kind: output, shape index: {}]
  %s3 = sld [smem:[#allocation0]]
  $region41: #{_cic_forward_impl.4} parent=0
    _
  %s5 = ssub.s32 1, %s3
  %s6 = scalar_select 0, %s5, %s3
  loop: start=0, step=1, limit=4
  $region2: #{_cic_forward_impl.4} parent=0 // loop_pre_header
    _
  $region3: #{_cic_forward_impl.4} parent=0 // loop_header
    %s8 = sphi 0, %s12
    %p9 = scmp.ge.s32.totalorder %s8, 4
    %s15 = sphi 0, %s34
    %s16 = sphi 0, %s30
    %s17 = sphi 0, %s26
    %s18 = sphi 0, %s15
    %s19 = sphi 0, %s16
    %s20 = sphi 0, %s17
    %s21 = sphi 0, %s18
    %s22 = sphi 0, %s19
    %s23 = sphi 0, %s20
    %s39 = sphi 0, %s41
    %s42 = sphi 0, %s39
    %s43 = sphi 0, %s42
    %s59 = sphi 0, %s43
    %s67 = sphi 0, %s69
    %s70 = sphi 0, %s67
    %s71 = sphi 0, %s70
    %s87 = sphi 0, %s71
    %s97 = sphi 0, %s99
    %s100 = sphi 0, %s97
    %s101 = sphi 0, %s100
    %s117 = sphi 0, %s101
  $region4: #{_cic_forward_impl.4} parent=0 // loop_header_branch
    %11 = sbr.rel (%p9) target = $region8
  $region5: #{_cic_forward_impl.4} parent=0 // loop_body
    %s13 = ssub.s32 %s8, 1
    %s14 = ssub.s32 %s8, 2
    %s24 = sadd.s32 1, %s17
    %p25 = scmp.ge.s32.totalorder %s24, 1
    %s26 = scalar_select %p25, 0, %s24
    %s27 = sadd.s32 1, %s16
    %s28 = scalar_select %p25, %s27, %s16
    %p29 = scmp.ge.s32.totalorder %s28, 1
    %s30 = scalar_select %p29, 0, %s28
    %s31 = sadd.s32 1, %s15
    %s32 = scalar_select %p29, %s31, %s15
    %p33 = scmp.ge.s32.totalorder %s32, 2
    %s34 = scalar_select %p33, 0, %s32
    %s35 = ssub.s32 %s15, %s34
    %s36 = ssub.s32 %s16, %s30
    %s37 = sor.u32 %s35, %s36
    %p38 = scmp.eq.s32.totalorder %s37, 0
    %s40 = sadd.s32 %s39, 1
    %s41 = scalar_select %p38, %s39, %s40
    %p44 = pneg %p38
    %p45 = scmp.eq.s32.totalorder %s8, 1
    %p46 = por %p44, %p45
    %p47 = scmp.ne.s32.totalorder %s39, %s42
    %p48 = scmp.eq.s32.totalorder %s8, 0
    %p49 = por %p47, %p48
    %p50 = scmp.ne.s32.totalorder %s39, %s42
    %p51 = scmp.eq.s32.totalorder %s13, 1
    %p52 = por %p50, %p51
    %p53 = scmp.ne.s32.totalorder %s42, %s43
    %p54 = scmp.eq.s32.totalorder %s13, 0
    %p55 = por %p53, %p54
    %p56 = scmp.ne.s32.totalorder %s42, %s43
    %p57 = scmp.eq.s32.totalorder %s14, 1
    %p58 = por %p56, %p57
    %p60 = scmp.ne.s32.totalorder %s43, %s59
    %p61 = scmp.eq.s32.totalorder %s14, 0
    %p62 = por %p60, %p61
    %s63 = ssub.s32 %s15, %s34
    %s64 = ssub.s32 %s17, %s26
    %s65 = sor.u32 %s63, %s64
    %p66 = scmp.eq.s32.totalorder %s65, 0
    %s68 = sadd.s32 %s67, 1
    %s69 = scalar_select %p66, %s67, %s68
    %p72 = pneg %p66
    %p73 = scmp.eq.s32.totalorder %s8, 1
    %p74 = por %p72, %p73
    %p75 = scmp.ne.s32.totalorder %s67, %s70
    %p76 = scmp.eq.s32.totalorder %s8, 0
    %p77 = por %p75, %p76
    %p78 = scmp.ne.s32.totalorder %s67, %s70
    %p79 = scmp.eq.s32.totalorder %s13, 1
    %p80 = por %p78, %p79
    %p81 = scmp.ne.s32.totalorder %s70, %s71
    %p82 = scmp.eq.s32.totalorder %s13, 0
    %p83 = por %p81, %p82
    %p84 = scmp.ne.s32.totalorder %s70, %s71
    %p85 = scmp.eq.s32.totalorder %s14, 1
    %p86 = por %p84, %p85
    %p88 = scmp.ne.s32.totalorder %s71, %s87
    %p89 = scmp.eq.s32.totalorder %s14, 0
    %p90 = por %p88, %p89
    %s91 = ssub.s32 %s15, %s34
    %s92 = ssub.s32 %s16, %s30
    %s93 = sor.u32 %s91, %s92
    %s94 = ssub.s32 %s17, %s26
    %s95 = sor.u32 %s93, %s94
    %p96 = scmp.eq.s32.totalorder %s95, 0
    %s98 = sadd.s32 %s97, 1
    %s99 = scalar_select %p96, %s97, %s98
    %p102 = pneg %p96
    %p103 = scmp.eq.s32.totalorder %s8, 1
    %p104 = por %p102, %p103
    %p105 = scmp.ne.s32.totalorder %s97, %s100
    %p106 = scmp.eq.s32.totalorder %s8, 0
    %p107 = por %p105, %p106
    %p108 = scmp.ne.s32.totalorder %s97, %s100
    %p109 = scmp.eq.s32.totalorder %s13, 1
    %p110 = por %p108, %p109
    %p111 = scmp.ne.s32.totalorder %s100, %s101
    %p112 = scmp.eq.s32.totalorder %s13, 0
    %p113 = por %p111, %p112
    %p114 = scmp.ne.s32.totalorder %s100, %s101
    %p115 = scmp.eq.s32.totalorder %s14, 1
    %p116 = por %p114, %p115
    %p118 = scmp.ne.s32.totalorder %s101, %s117
    %p119 = scmp.eq.s32.totalorder %s14, 0
    %p120 = por %p118, %p119
    %p121 = scmp.le.s32.totalorder 1, %s8
    %p122 = scmp.lt.s32.totalorder %s8, 3
    %p123 = pnand %p121, %p122
    %p124 = pneg %p123
    // Predicated region
    $region9: #{_cic_forward_impl.4} parent=5 // pred_check
      _
    $region10: #{_cic_forward_impl.4} parent=5 // pred_check_branch
      %126 = sbr.rel (%p123) target = $region12
    $region11: #{_cic_forward_impl.4} parent=5 // pred_region
      %s127 = ssub.s32 %s8, 1
    $region12: #{_cic_forward_impl.4} parent=5 // pred_fallthru
      _
    %p128 = scmp.lt.s32.totalorder %s8, 2
    // Predicated region
    $region13: #{_cic_forward_impl.4} parent=5 // pred_check
      %p129 = pneg %p128
    $region14: #{_cic_forward_impl.4} parent=5 // pred_check_branch
      %131 = sbr.rel (%p129) target = $region16
    $region15: #{_cic_forward_impl.4} parent=5 // pred_region
      // Predicated region
      $region17: #{_cic_forward_impl.4} parent=15 // pred_check
        %p132 = pneg %p49
      $region18: #{_cic_forward_impl.4} parent=15 // pred_check_branch
        %134 = sbr.rel (%p132) target = $region20
      $region19: #{_cic_forward_impl.4} parent=15 // pred_region
        %s135 = smul.u32 16, %s16
        %p136 = scmp.lt.s32.totalorder %s15, 1
        %s137 = scalar_select %p136, %s15, 1
        %p138 = scmp.lt.s32.totalorder %s135, 15
        %s139 = scalar_select %p138, %s135, 15
        %s140 = smul.addr %s137, 16
        %s141 = sadd.s32 %s139, %s140
        %s142 = smul.addr %s141, 8
        %s143 = scalar_lea.vmem %s0, %s142
        %s144 = smul.u32 16, %s16
      $region20: #{_cic_forward_impl.4} parent=15 // pred_fallthru
        _
      // Predicated region
      $region21: #{_cic_forward_impl.4} parent=15 // pred_check
        %p145 = pneg %p77
      $region22: #{_cic_forward_impl.4} parent=15 // pred_check_branch
        %147 = sbr.rel (%p145) target = $region24
      $region23: #{_cic_forward_impl.4} parent=15 // pred_region
        %p148 = scmp.lt.s32.totalorder %s15, 1
        %s149 = scalar_select %p148, %s15, 1
        %p150 = scmp.lt.s32.totalorder %s17, 0
        %s151 = scalar_select %p150, %s17, 0
        %s152 = sadd.s32 %s151, %s149
        %s153 = smul.addr %s152, 8
        %s154 = scalar_lea.vmem %s1, %s153
      $region24: #{_cic_forward_impl.4} parent=15 // pred_fallthru
        _
    $region16: #{_cic_forward_impl.4} parent=5 // pred_fallthru
      _
    %p155 = scmp.le.s32.totalorder 1, %s8
    %p156 = scmp.lt.s32.totalorder %s8, 3
    %p157 = pnand %p155, %p156
    %p158 = pneg %p157
    // Predicated region
    $region25: #{_cic_forward_impl.4} parent=5 // pred_check
      _
    $region26: #{_cic_forward_impl.4} parent=5 // pred_check_branch
      %160 = sbr.rel (%p157) target = $region28
    $region27: #{_cic_forward_impl.4} parent=5 // pred_region
      %s161 = ssub.s32 %s8, 1
      %s162 = smul.u32 16, %s19
      %p163 = scmp.lt.s32.totalorder %s18, 1
      %s164 = scalar_select %p163, %s18, 1
      %p165 = scmp.lt.s32.totalorder %s162, 15
      %s166 = scalar_select %p165, %s162, 15
      %s167 = smul.addr %s164, 16
      %s168 = sadd.s32 %s166, %s167
      %s169 = smul.addr %s168, 8
      %s170 = scalar_lea.vmem %s0, %s169
      %p171 = pneg %p55
      %p172 = pneg %p52
      %p173 = scmp.lt.s32.totalorder %s18, 1
      %s174 = scalar_select %p173, %s18, 1
      %p175 = scmp.lt.s32.totalorder %s20, 0
      %s176 = scalar_select %p175, %s20, 0
      %s177 = sadd.s32 %s176, %s174
      %s178 = smul.addr %s177, 8
      %s179 = scalar_lea.vmem %s1, %s178
      %p180 = pneg %p83
      %p181 = pneg %p80
      %p182 = pneg %p113
      %p183 = pneg %p110
      %s184 = smul.u32 16, %s19
      %p185 = scmp.lt.s32.totalorder %s18, 1
      %s186 = scalar_select %p185, %s18, 1
      %p187 = scmp.lt.s32.totalorder %s184, 15
      %s188 = scalar_select %p187, %s184, 15
      %p189 = scmp.lt.s32.totalorder %s20, 0
      %s190 = scalar_select %p189, %s20, 0
      %s191 = sadd.s32 %s190, %s188
      %s192 = smul.addr %s186, 16
      %s193 = sadd.s32 %s191, %s192
      %s194 = smul.addr %s193, 8
      %s195 = scalar_lea.vmem %s2, %s194
      %s196 = smul.u32 16, %s19
      %p197 = scmp.lt.s32.totalorder %s18, 1
      %s198 = scalar_select %p197, %s18, 1
      %p199 = scmp.lt.s32.totalorder %s196, 15
      %s200 = scalar_select %p199, %s196, 15
      %s201 = smul.addr %s198, 16
      %s202 = sadd.s32 %s200, %s201
      %s203 = smul.addr %s202, 8
      %s204 = scalar_lea.vmem %s0, %s203
      %s205 = smul.u32 16, %s19
      %p206 = scmp.lt.s32.totalorder %s18, 1
      %s207 = scalar_select %p206, %s18, 1
      %p208 = scmp.lt.s32.totalorder %s20, 0
      %s209 = scalar_select %p208, %s20, 0
      %s210 = sadd.s32 %s209, %s207
      %s211 = smul.addr %s210, 8
      %s212 = scalar_lea.vmem %s1, %s211
      %s213 = smul.u32 16, %s19
      %p214 = scmp.lt.s32.totalorder %s18, 1
      %s215 = scalar_select %p214, %s18, 1
      %p216 = scmp.lt.s32.totalorder %s213, 15
      %s217 = scalar_select %p216, %s213, 15
      %p218 = scmp.lt.s32.totalorder %s20, 0
      %s219 = scalar_select %p218, %s20, 0
      %s220 = sadd.s32 %s219, %s217
      %s221 = smul.addr %s215, 16
      %s222 = sadd.s32 %s220, %s221
      %s223 = smul.addr %s222, 8
      %s224 = scalar_lea.vmem %s2, %s223
      %s225 = smul.u32 16, %s19
      %v226 = vld [vmem:[%s204] sm:$0xff]
      %v227 = vld [vmem:[%s204 + $0x8] sm:$0xff]
      %v228 = vld [vmem:[%s204 + $0x10] sm:$0xff]
      %v229 = vld [vmem:[%s204 + $0x18] sm:$0xff]
      %v230 = vld [vmem:[%s204 + $0x20] sm:$0xff]
      %v231 = vld [vmem:[%s204 + $0x28] sm:$0xff]
      %v232 = vld [vmem:[%s204 + $0x30] sm:$0xff]
      %v233 = vld [vmem:[%s204 + $0x38] sm:$0xff]
      %v234 = vld [vmem:[%s204 + $0x40] sm:$0xff]
      %v235 = vld [vmem:[%s204 + $0x48] sm:$0xff]
      %v236 = vld [vmem:[%s204 + $0x50] sm:$0xff]
      %v237 = vld [vmem:[%s204 + $0x58] sm:$0xff]
      %v238 = vld [vmem:[%s204 + $0x60] sm:$0xff]
      %v239 = vld [vmem:[%s204 + $0x68] sm:$0xff]
      %v240 = vld [vmem:[%s204 + $0x70] sm:$0xff]
      %v241 = vld [vmem:[%s204 + $0x78] sm:$0xff]
      %v242 = vld [vmem:[%s212] sm:$0xff]
      %vm243 = vcmask 64512
      %v245 = vsel %vm243, %v226, 0
      %v248 = vsel %vm243, %v227, 0
      %v251 = vsel %vm243, %v228, 0
      %v254 = vsel %vm243, %v229, 0
      %v257 = vsel %vm243, %v230, 0
      %v260 = vsel %vm243, %v231, 0
      %v263 = vsel %vm243, %v232, 0
      %v266 = vsel %vm243, %v233, 0
      %v269 = vsel %vm243, %v234, 0
      %v272 = vsel %vm243, %v235, 0
      %v275 = vsel %vm243, %v236, 0
      %v278 = vsel %vm243, %v237, 0
      %v281 = vsel %vm243, %v238, 0
      %v284 = vsel %vm243, %v239, 0
      %v287 = vsel %vm243, %v240, 0
      %v290 = vsel %vm243, %v241, 0
      %292 = vmatprep.subr.mxu0 0.0
      %293 = vmatpush1.msra.mxu0 0.0
      %294 = vmatprep.subr.mxu0 0.0
      %295 = vmatpush1.msra.mxu0 0.0
      %296 = vmatprep.subr.mxu0 0.0
      %297 = vmatpush1.msra.mxu0 0.0
      %298 = vmatprep.subr.mxu0 0.0
      %299 = vmatpush1.msra.mxu0 0.0
      %300 = vmatprep.subr.mxu0 0.0
      %301 = vmatpush1.msra.mxu0 0.0
      %302 = vmatprep.subr.mxu0 0.0
      %303 = vmatpush1.msra.mxu0 0.0
      %304 = vmatprep.subr.mxu0 0.0
      %305 = vmatpush1.msra.mxu0 0.0
      %306 = vmatprep.subr.mxu0 0.0
      %307 = vmatpush1.msra.mxu0 0.0
      %308 = vmatprep.subr.mxu0 0.0
      %309 = vmatpush1.msra.mxu0 0.0
      %310 = vmatprep.subr.mxu0 0.0
      %311 = vmatpush1.msra.mxu0 0.0
      %312 = vmatprep.subr.mxu0 0.0
      %313 = vmatpush1.msra.mxu0 0.0
      %314 = vmatprep.subr.mxu0 0.0
      %315 = vmatpush1.msra.mxu0 0.0
      %316 = vmatprep.subr.mxu0 0.0
      %317 = vmatpush1.msra.mxu0 0.0
      %318 = vmatprep.subr.mxu0 0.0
      %319 = vmatpush1.msra.mxu0 0.0
      %320 = vmatprep.subr.mxu0 0.0
      %321 = vmatpush1.msra.mxu0 0.0
      %322 = vmatprep.subr.mxu0 0.0
      %323 = vmatpush1.msra.mxu0 %v242
      %324 = vmatprep.subr.mxu0 0.0
      %325 = vmatpush2.msra.mxu0 0.0
      %326 = vmatprep.subr.mxu0 0.0
      %327 = vmatpush2.msra.mxu0 0.0
      %328 = vmatprep.subr.mxu0 0.0
      %329 = vmatpush2.msra.mxu0 0.0
      %330 = vmatprep.subr.mxu0 0.0
      %331 = vmatpush2.msra.mxu0 0.0
      %332 = vmatprep.subr.mxu0 0.0
      %333 = vmatpush2.msra.mxu0 0.0
      %334 = vmatprep.subr.mxu0 0.0
      %335 = vmatpush2.msra.mxu0 0.0
      %336 = vmatprep.subr.mxu0 0.0
      %337 = vmatpush2.msra.mxu0 0.0
      %338 = vmatprep.subr.mxu0 0.0
      %339 = vmatpush2.msra.mxu0 0.0
      %340 = vmatprep.subr.mxu0 0.0
      %341 = vmatpush2.msra.mxu0 0.0
      %342 = vmatprep.subr.mxu0 0.0
      %343 = vmatpush2.msra.mxu0 0.0
      %344 = vmatprep.subr.mxu0 0.0
      %345 = vmatpush2.msra.mxu0 0.0
      %346 = vmatprep.subr.mxu0 0.0
      %347 = vmatpush2.msra.mxu0 0.0
      %348 = vmatprep.subr.mxu0 0.0
      %349 = vmatpush2.msra.mxu0 0.0
      %350 = vmatprep.subr.mxu0 0.0
      %351 = vmatpush2.msra.mxu0 0.0
      %352 = vmatprep.subr.mxu0 0.0
      %353 = vmatpush2.msra.mxu0 0.0
      %354 = vmatprep.subr.mxu0 0.0
      %355 = vmatpush2.msra.mxu0 0.0
      %356 = vmatprep.mubr.f32.mxu0 0.0
      %357 = vmatmul.mubr.f32.gmra.mxu0 %v245
      %v358 = vpop.f32.mrf.mxu0
      %v359 = vadd.f32 0.0, %v358
      %v360 = vpop.f32.mrf.mxu0
      %361 = vmatprep.mubr.f32.mxu0 0.0
      %362 = vmatmul.mubr.f32.gmra.mxu0 %v248
      %v363 = vpop.f32.mrf.mxu0
      %v364 = vadd.f32 0.0, %v363
      %v365 = vpop.f32.mrf.mxu0
      %366 = vmatprep.mubr.f32.mxu0 0.0
      %367 = vmatmul.mubr.f32.gmra.mxu0 %v251
      %v368 = vpop.f32.mrf.mxu0
      %v369 = vadd.f32 0.0, %v368
      %v370 = vpop.f32.mrf.mxu0
      %371 = vmatprep.mubr.f32.mxu0 0.0
      %372 = vmatmul.mubr.f32.gmra.mxu0 %v254
      %v373 = vpop.f32.mrf.mxu0
      %v374 = vadd.f32 0.0, %v373
      %v375 = vpop.f32.mrf.mxu0
      %376 = vmatprep.mubr.f32.mxu0 0.0
      %377 = vmatmul.mubr.f32.gmra.mxu0 %v257
      %v378 = vpop.f32.mrf.mxu0
      %v379 = vadd.f32 0.0, %v378
      %v380 = vpop.f32.mrf.mxu0
      %381 = vmatprep.mubr.f32.mxu0 0.0
      %382 = vmatmul.mubr.f32.gmra.mxu0 %v260
      %v383 = vpop.f32.mrf.mxu0
      %v384 = vadd.f32 0.0, %v383
      %v385 = vpop.f32.mrf.mxu0
      %386 = vmatprep.mubr.f32.mxu0 0.0
      %387 = vmatmul.mubr.f32.gmra.mxu0 %v263
      %v388 = vpop.f32.mrf.mxu0
      %v389 = vadd.f32 0.0, %v388
      %v390 = vpop.f32.mrf.mxu0
      %391 = vmatprep.mubr.f32.mxu0 0.0
      %392 = vmatmul.mubr.f32.gmra.mxu0 %v266
      %v393 = vpop.f32.mrf.mxu0
      %v394 = vadd.f32 0.0, %v393
      %v395 = vpop.f32.mrf.mxu0
      %396 = vmatprep.mubr.f32.mxu0 0.0
      %397 = vmatmul.mubr.f32.gmra.mxu0 %v269
      %v398 = vpop.f32.mrf.mxu0
      %v399 = vadd.f32 0.0, %v398
      %v400 = vpop.f32.mrf.mxu0
      %401 = vmatprep.mubr.f32.mxu0 0.0
      %402 = vmatmul.mubr.f32.gmra.mxu0 %v272
      %v403 = vpop.f32.mrf.mxu0
      %v404 = vadd.f32 0.0, %v403
      %v405 = vpop.f32.mrf.mxu0
      %406 = vmatprep.mubr.f32.mxu0 0.0
      %407 = vmatmul.mubr.f32.gmra.mxu0 %v275
      %v408 = vpop.f32.mrf.mxu0
      %v409 = vadd.f32 0.0, %v408
      %v410 = vpop.f32.mrf.mxu0
      %411 = vmatprep.mubr.f32.mxu0 0.0
      %412 = vmatmul.mubr.f32.gmra.mxu0 %v278
      %v413 = vpop.f32.mrf.mxu0
      %v414 = vadd.f32 0.0, %v413
      %v415 = vpop.f32.mrf.mxu0
      %416 = vmatprep.mubr.f32.mxu0 0.0
      %417 = vmatmul.mubr.f32.gmra.mxu0 %v281
      %v418 = vpop.f32.mrf.mxu0
      %v419 = vadd.f32 0.0, %v418
      %v420 = vpop.f32.mrf.mxu0
      %421 = vmatprep.mubr.f32.mxu0 0.0
      %422 = vmatmul.mubr.f32.gmra.mxu0 %v284
      %v423 = vpop.f32.mrf.mxu0
      %v424 = vadd.f32 0.0, %v423
      %v425 = vpop.f32.mrf.mxu0
      %426 = vmatprep.mubr.f32.mxu0 0.0
      %427 = vmatmul.mubr.f32.gmra.mxu0 %v287
      %v428 = vpop.f32.mrf.mxu0
      %v429 = vadd.f32 0.0, %v428
      %v430 = vpop.f32.mrf.mxu0
      %431 = vmatprep.mubr.f32.mxu0 0.0
      %432 = vmatmul.mubr.f32.gmra.mxu0 %v290
      %v433 = vpop.f32.mrf.mxu0
      %v434 = vadd.f32 0.0, %v433
      %v435 = vpop.f32.mrf.mxu0
      %436 = vdwg.mxu0
      %v437 = vmul.f32 %v226, %v226
      %v438 = vmul.f32 %v227, %v227
      %v439 = vmul.f32 %v228, %v228
      %v440 = vmul.f32 %v229, %v229
      %v441 = vmul.f32 %v230, %v230
      %v442 = vmul.f32 %v231, %v231
      %v443 = vmul.f32 %v232, %v232
      %v444 = vmul.f32 %v233, %v233
      %v445 = vmul.f32 %v234, %v234
      %v446 = vmul.f32 %v235, %v235
      %v447 = vmul.f32 %v236, %v236
      %v448 = vmul.f32 %v237, %v237
      %v449 = vmul.f32 %v238, %v238
      %v450 = vmul.f32 %v239, %v239
      %v451 = vmul.f32 %v240, %v240
      %v452 = vmul.f32 %v241, %v241
      %v453 = vsel %vm243, %v437, 0.0
      %454 = vadd.xlane.f32.xlu0 %v453
      %v455 = vpop.xlane.xlu0 %454
      %v456 = vsel %vm243, %v438, 0.0
      %457 = vadd.xlane.f32.xlu0 %v456
      %v458 = vpop.xlane.xlu0 %457
      %v459 = vsel %vm243, %v439, 0.0
      %460 = vadd.xlane.f32.xlu0 %v459
      %v461 = vpop.xlane.xlu0 %460
      %v462 = vsel %vm243, %v440, 0.0
      %463 = vadd.xlane.f32.xlu0 %v462
      %v464 = vpop.xlane.xlu0 %463
      %v465 = vsel %vm243, %v441, 0.0
      %466 = vadd.xlane.f32.xlu0 %v465
      %v467 = vpop.xlane.xlu0 %466
      %v468 = vsel %vm243, %v442, 0.0
      %469 = vadd.xlane.f32.xlu0 %v468
      %v470 = vpop.xlane.xlu0 %469
      %v471 = vsel %vm243, %v443, 0.0
      %472 = vadd.xlane.f32.xlu0 %v471
      %v473 = vpop.xlane.xlu0 %472
      %v474 = vsel %vm243, %v444, 0.0
      %475 = vadd.xlane.f32.xlu0 %v474
      %v476 = vpop.xlane.xlu0 %475
      %v477 = vsel %vm243, %v445, 0.0
      %478 = vadd.xlane.f32.xlu0 %v477
      %v479 = vpop.xlane.xlu0 %478
      %v480 = vsel %vm243, %v446, 0.0
      %481 = vadd.xlane.f32.xlu0 %v480
      %v482 = vpop.xlane.xlu0 %481
      %v483 = vsel %vm243, %v447, 0.0
      %484 = vadd.xlane.f32.xlu0 %v483
      %v485 = vpop.xlane.xlu0 %484
      %v486 = vsel %vm243, %v448, 0.0
      %487 = vadd.xlane.f32.xlu0 %v486
      %v488 = vpop.xlane.xlu0 %487
      %v489 = vsel %vm243, %v449, 0.0
      %490 = vadd.xlane.f32.xlu0 %v489
      %v491 = vpop.xlane.xlu0 %490
      %v492 = vsel %vm243, %v450, 0.0
      %493 = vadd.xlane.f32.xlu0 %v492
      %v494 = vpop.xlane.xlu0 %493
      %v495 = vsel %vm243, %v451, 0.0
      %496 = vadd.xlane.f32.xlu0 %v495
      %v497 = vpop.xlane.xlu0 %496
      %v498 = vsel %vm243, %v452, 0.0
      %499 = vadd.xlane.f32.xlu0 %v498
      %v500 = vpop.xlane.xlu0 %499
      %v501 = vmul.f32 %v242, %v242
      %v502 = vrot.slane %v501, 4
      %v503 = vadd.f32 %v501, %v502
      %v504 = vrot.slane %v503, 2
      %v505 = vadd.f32 %v503, %v504
      %v506 = vrot.slane %v505, 1
      %v507 = vadd.f32 %v505, %v506
      %v508 = vmul.f32 %v359, 2.0
      %v509 = vmul.f32 %v364, 2.0
      %v510 = vmul.f32 %v369, 2.0
      %v511 = vmul.f32 %v374, 2.0
      %v512 = vmul.f32 %v379, 2.0
      %v513 = vmul.f32 %v384, 2.0
      %v514 = vmul.f32 %v389, 2.0
      %v515 = vmul.f32 %v394, 2.0
      %v516 = vmul.f32 %v399, 2.0
      %v517 = vmul.f32 %v404, 2.0
      %v518 = vmul.f32 %v409, 2.0
      %v519 = vmul.f32 %v414, 2.0
      %v520 = vmul.f32 %v419, 2.0
      %v521 = vmul.f32 %v424, 2.0
      %v522 = vmul.f32 %v429, 2.0
      %v523 = vmul.f32 %v434, 2.0
      %v524 = vsub.f32 %v508, %v455
      %v525 = vsub.f32 %v509, %v458
      %v526 = vsub.f32 %v510, %v461
      %v527 = vsub.f32 %v511, %v464
      %v528 = vsub.f32 %v512, %v467
      %v529 = vsub.f32 %v513, %v470
      %v530 = vsub.f32 %v514, %v473
      %v531 = vsub.f32 %v515, %v476
      %v532 = vsub.f32 %v516, %v479
      %v533 = vsub.f32 %v517, %v482
      %v534 = vsub.f32 %v518, %v485
      %v535 = vsub.f32 %v519, %v488
      %v536 = vsub.f32 %v520, %v491
      %v537 = vsub.f32 %v521, %v494
      %v538 = vsub.f32 %v522, %v497
      %v539 = vsub.f32 %v523, %v500
      %v540 = vsub.f32 %v524, %v507
      %v541 = vsub.f32 %v525, %v507
      %v542 = vsub.f32 %v526, %v507
      %v543 = vsub.f32 %v527, %v507
      %v544 = vsub.f32 %v528, %v507
      %v545 = vsub.f32 %v529, %v507
      %v546 = vsub.f32 %v530, %v507
      %v547 = vsub.f32 %v531, %v507
      %v548 = vsub.f32 %v532, %v507
      %v549 = vsub.f32 %v533, %v507
      %v550 = vsub.f32 %v534, %v507
      %v551 = vsub.f32 %v535, %v507
      %v552 = vsub.f32 %v536, %v507
      %v553 = vsub.f32 %v537, %v507
      %v554 = vsub.f32 %v538, %v507
      %v555 = vsub.f32 %v539, %v507
      %556 = vst [vmem:[%s224] sm:$0xff] %v540
      %557 = vst [vmem:[%s224 + $0x8] sm:$0xff] %v541
      %558 = vst [vmem:[%s224 + $0x10] sm:$0xff] %v542
      %559 = vst [vmem:[%s224 + $0x18] sm:$0xff] %v543
      %560 = vst [vmem:[%s224 + $0x20] sm:$0xff] %v544
      %561 = vst [vmem:[%s224 + $0x28] sm:$0xff] %v545
      %562 = vst [vmem:[%s224 + $0x30] sm:$0xff] %v546
      %563 = vst [vmem:[%s224 + $0x38] sm:$0xff] %v547
      %564 = vst [vmem:[%s224 + $0x40] sm:$0xff] %v548
      %565 = vst [vmem:[%s224 + $0x48] sm:$0xff] %v549
      %566 = vst [vmem:[%s224 + $0x50] sm:$0xff] %v550
      %567 = vst [vmem:[%s224 + $0x58] sm:$0xff] %v551
      %568 = vst [vmem:[%s224 + $0x60] sm:$0xff] %v552
      %569 = vst [vmem:[%s224 + $0x68] sm:$0xff] %v553
      %570 = vst [vmem:[%s224 + $0x70] sm:$0xff] %v554
      %571 = vst [vmem:[%s224 + $0x78] sm:$0xff] %v555
      %s572 = smul.u32 16, %s19
      %p573 = scmp.lt.s32.totalorder %s18, 1
      %s574 = scalar_select %p573, %s18, 1
      %p575 = scmp.lt.s32.totalorder %s572, 15
      %s576 = scalar_select %p575, %s572, 15
      %p577 = scmp.lt.s32.totalorder %s20, 0
      %s578 = scalar_select %p577, %s20, 0
      %s579 = sadd.s32 %s578, %s576
      %s580 = smul.addr %s574, 16
      %s581 = sadd.s32 %s579, %s580
      %s582 = smul.addr %s581, 8
      %s583 = scalar_lea.vmem %s2, %s582
      // Predicated region
      $region29: #{_cic_forward_impl.4} parent=27 // pred_check
        %p584 = pneg %p110
      $region30: #{_cic_forward_impl.4} parent=27 // pred_check_branch
        %586 = sbr.rel (%p584) target = $region32
      $region31: #{_cic_forward_impl.4} parent=27 // pred_region
        %s587 = smul.u32 16, %s19
      $region32: #{_cic_forward_impl.4} parent=27 // pred_fallthru
        _
    $region28: #{_cic_forward_impl.4} parent=5 // pred_fallthru
      _
    %p588 = scmp.le.s32.totalorder 2, %s8
    // Predicated region
    $region33: #{_cic_forward_impl.4} parent=5 // pred_check
      %p589 = pneg %p588
    $region34: #{_cic_forward_impl.4} parent=5 // pred_check_branch
      %591 = sbr.rel (%p589) target = $region36
    $region35: #{_cic_forward_impl.4} parent=5 // pred_region
      %s592 = ssub.s32 %s8, 2
      // Predicated region
      $region37: #{_cic_forward_impl.4} parent=35 // pred_check
        %p593 = pneg %p116
      $region38: #{_cic_forward_impl.4} parent=35 // pred_check_branch
        %595 = sbr.rel (%p593) target = $region40
      $region39: #{_cic_forward_impl.4} parent=35 // pred_region
        %s596 = smul.u32 16, %s22
        %p597 = scmp.lt.s32.totalorder %s21, 1
        %s598 = scalar_select %p597, %s21, 1
        %p599 = scmp.lt.s32.totalorder %s596, 15
        %s600 = scalar_select %p599, %s596, 15
        %p601 = scmp.lt.s32.totalorder %s23, 0
        %s602 = scalar_select %p601, %s23, 0
        %s603 = sadd.s32 %s602, %s600
        %s604 = smul.addr %s598, 16
        %s605 = sadd.s32 %s603, %s604
        %s606 = smul.addr %s605, 8
        %s607 = scalar_lea.vmem %s2, %s606
      $region40: #{_cic_forward_impl.4} parent=35 // pred_fallthru
        _
    $region36: #{_cic_forward_impl.4} parent=5 // pred_fallthru
      _
  $region6: #{_cic_forward_impl.4} parent=0 // loop_footer
    %s12 = sadd.s32 1, %s8
  $region7: #{_cic_forward_impl.4} parent=0 // loop_footer_branch
    %7 = sbr.rel target = $region3
  $region8: #{_cic_forward_impl.4} parent=0 // loop_exit
    _

// kernel: _cic_forward_impl.3
$region0: #{_cic_forward_impl.3}
  #allocation0 [shape = 'u32[]', space=smem, size = 0x4, offset = 0x4, fixed_abs, tag = 'smem constant byte address 0x4 - core index']
  #allocation1 [shape = 'u32[144,128]{1,0:T(1,128)}', space=vmem, size = 0x12000, scoped, tag = 'internal scratch']
  %s0 = inlined_call_operand.vmem [shape: bf16[2,16,128], index: 0, kind: input, shape index: {}]
  %s1 = inlined_call_operand.vmem [shape: bf16[8,16], index: 1, kind: input, shape index: {}]
  %s2 = inlined_call_operand.vmem [shape: f32[8,1], index: 2, kind: input, shape index: {}]
  %s3 = inlined_call_operand.vmem [shape: bf16[2,8,128], index: 3, kind: output, shape index: {}]
  %s4 = sld [smem:[#allocation0]]
  $region45: #{_cic_forward_impl.3} parent=0
    _
  %s6 = ssub.s32 1, %s4
  %s7 = scalar_select 0, %s6, %s4
  loop: start=0, step=1, limit=4
  $region2: #{_cic_forward_impl.3} parent=0 // loop_pre_header
    _
  $region3: #{_cic_forward_impl.3} parent=0 // loop_header
    %s9 = sphi 0, %s13
    %p10 = scmp.ge.s32.totalorder %s9, 4
    %s16 = sphi 0, %s28
    %s17 = sphi 0, %s24
    %s18 = sphi 0, %s16
    %s19 = sphi 0, %s17
    %s20 = sphi 0, %s18
    %s21 = sphi 0, %s19
    %s33 = sphi 0, %s35
    %s36 = sphi 0, %s33
    %s37 = sphi 0, %s36
    %s53 = sphi 0, %s37
    %s57 = sphi 0, %s57
    %s59 = sphi 0, %s57
    %s60 = sphi 0, %s59
    %s74 = sphi 0, %s60
    %s78 = sphi 0, %s78
    %s80 = sphi 0, %s78
    %s81 = sphi 0, %s80
    %s95 = sphi 0, %s81
    %s103 = sphi 0, %s105
    %s106 = sphi 0, %s103
    %s107 = sphi 0, %s106
    %s123 = sphi 0, %s107
  $region4: #{_cic_forward_impl.3} parent=0 // loop_header_branch
    %12 = sbr.rel (%p10) target = $region8
  $region5: #{_cic_forward_impl.3} parent=0 // loop_body
    %s14 = ssub.s32 %s9, 1
    %s15 = ssub.s32 %s9, 2
    %s22 = sadd.s32 1, %s17
    %p23 = scmp.ge.s32.totalorder %s22, 1
    %s24 = scalar_select %p23, 0, %s22
    %s25 = sadd.s32 1, %s16
    %s26 = scalar_select %p23, %s25, %s16
    %p27 = scmp.ge.s32.totalorder %s26, 2
    %s28 = scalar_select %p27, 0, %s26
    %s29 = ssub.s32 %s16, %s28
    %s30 = ssub.s32 %s17, %s24
    %s31 = sor.u32 %s29, %s30
    %p32 = scmp.eq.s32.totalorder %s31, 0
    %s34 = sadd.s32 %s33, 1
    %s35 = scalar_select %p32, %s33, %s34
    %p38 = pneg %p32
    %p39 = scmp.eq.s32.totalorder %s9, 1
    %p40 = por %p38, %p39
    %p41 = scmp.ne.s32.totalorder %s33, %s36
    %p42 = scmp.eq.s32.totalorder %s9, 0
    %p43 = por %p41, %p42
    %p44 = scmp.ne.s32.totalorder %s33, %s36
    %p45 = scmp.eq.s32.totalorder %s14, 1
    %p46 = por %p44, %p45
    %p47 = scmp.ne.s32.totalorder %s36, %s37
    %p48 = scmp.eq.s32.totalorder %s14, 0
    %p49 = por %p47, %p48
    %p50 = scmp.ne.s32.totalorder %s36, %s37
    %p51 = scmp.eq.s32.totalorder %s15, 1
    %p52 = por %p50, %p51
    %p54 = scmp.ne.s32.totalorder %s37, %s53
    %p55 = scmp.eq.s32.totalorder %s15, 0
    %p56 = por %p54, %p55
    %s58 = sadd.s32 %s57, 1
    %p61 = scmp.eq.s32.totalorder %s9, 1
    %p62 = scmp.ne.s32.totalorder %s57, %s59
    %p63 = scmp.eq.s32.totalorder %s9, 0
    %p64 = por %p62, %p63
    %p65 = scmp.ne.s32.totalorder %s57, %s59
    %p66 = scmp.eq.s32.totalorder %s14, 1
    %p67 = por %p65, %p66
    %p68 = scmp.ne.s32.totalorder %s59, %s60
    %p69 = scmp.eq.s32.totalorder %s14, 0
    %p70 = por %p68, %p69
    %p71 = scmp.ne.s32.totalorder %s59, %s60
    %p72 = scmp.eq.s32.totalorder %s15, 1
    %p73 = por %p71, %p72
    %p75 = scmp.ne.s32.totalorder %s60, %s74
    %p76 = scmp.eq.s32.totalorder %s15, 0
    %p77 = por %p75, %p76
    %s79 = sadd.s32 %s78, 1
    %p82 = scmp.eq.s32.totalorder %s9, 1
    %p83 = scmp.ne.s32.totalorder %s78, %s80
    %p84 = scmp.eq.s32.totalorder %s9, 0
    %p85 = por %p83, %p84
    %p86 = scmp.ne.s32.totalorder %s78, %s80
    %p87 = scmp.eq.s32.totalorder %s14, 1
    %p88 = por %p86, %p87
    %p89 = scmp.ne.s32.totalorder %s80, %s81
    %p90 = scmp.eq.s32.totalorder %s14, 0
    %p91 = por %p89, %p90
    %p92 = scmp.ne.s32.totalorder %s80, %s81
    %p93 = scmp.eq.s32.totalorder %s15, 1
    %p94 = por %p92, %p93
    %p96 = scmp.ne.s32.totalorder %s81, %s95
    %p97 = scmp.eq.s32.totalorder %s15, 0
    %p98 = por %p96, %p97
    %s99 = ssub.s32 %s16, %s28
    %s100 = ssub.s32 %s17, %s24
    %s101 = sor.u32 %s99, %s100
    %p102 = scmp.eq.s32.totalorder %s101, 0
    %s104 = sadd.s32 %s103, 1
    %s105 = scalar_select %p102, %s103, %s104
    %p108 = pneg %p102
    %p109 = scmp.eq.s32.totalorder %s9, 1
    %p110 = por %p108, %p109
    %p111 = scmp.ne.s32.totalorder %s103, %s106
    %p112 = scmp.eq.s32.totalorder %s9, 0
    %p113 = por %p111, %p112
    %p114 = scmp.ne.s32.totalorder %s103, %s106
    %p115 = scmp.eq.s32.totalorder %s14, 1
    %p116 = por %p114, %p115
    %p117 = scmp.ne.s32.totalorder %s106, %s107
    %p118 = scmp.eq.s32.totalorder %s14, 0
    %p119 = por %p117, %p118
    %p120 = scmp.ne.s32.totalorder %s106, %s107
    %p121 = scmp.eq.s32.totalorder %s15, 1
    %p122 = por %p120, %p121
    %p124 = scmp.ne.s32.totalorder %s107, %s123
    %p125 = scmp.eq.s32.totalorder %s15, 0
    %p126 = por %p124, %p125
    %p127 = scmp.le.s32.totalorder 1, %s9
    %p128 = scmp.lt.s32.totalorder %s9, 3
    %p129 = pnand %p127, %p128
    %p130 = pneg %p129
    // Predicated region
    $region9: #{_cic_forward_impl.3} parent=5 // pred_check
      _
    $region10: #{_cic_forward_impl.3} parent=5 // pred_check_branch
      %132 = sbr.rel (%p129) target = $region12
    $region11: #{_cic_forward_impl.3} parent=5 // pred_region
      %s133 = ssub.s32 %s9, 1
      // Predicated region
      $region13: #{_cic_forward_impl.3} parent=11 // pred_check
        %p134 = pneg %p70
      $region14: #{_cic_forward_impl.3} parent=11 // pred_check_branch
        %136 = sbr.rel (%p134) target = $region16
      $region15: #{_cic_forward_impl.3} parent=11 // pred_region
        _
      $region16: #{_cic_forward_impl.3} parent=11 // pred_fallthru
        _
      // Predicated region
      $region17: #{_cic_forward_impl.3} parent=11 // pred_check
        %p137 = pneg %p91
      $region18: #{_cic_forward_impl.3} parent=11 // pred_check_branch
        %139 = sbr.rel (%p137) target = $region20
      $region19: #{_cic_forward_impl.3} parent=11 // pred_region
        _
      $region20: #{_cic_forward_impl.3} parent=11 // pred_fallthru
        _
    $region12: #{_cic_forward_impl.3} parent=5 // pred_fallthru
      _
    %p140 = scmp.lt.s32.totalorder %s9, 2
    // Predicated region
    $region21: #{_cic_forward_impl.3} parent=5 // pred_check
      %p141 = pneg %p140
    $region22: #{_cic_forward_impl.3} parent=5 // pred_check_branch
      %143 = sbr.rel (%p141) target = $region24
    $region23: #{_cic_forward_impl.3} parent=5 // pred_region
      // Predicated region
      $region25: #{_cic_forward_impl.3} parent=23 // pred_check
        %p144 = pneg %p43
      $region26: #{_cic_forward_impl.3} parent=23 // pred_check_branch
        %146 = sbr.rel (%p144) target = $region28
      $region27: #{_cic_forward_impl.3} parent=23 // pred_region
        %p147 = scmp.lt.s32.totalorder %s16, 1
        %s148 = scalar_select %p147, %s16, 1
        %p149 = scmp.lt.s32.totalorder %s17, 0
        %s150 = scalar_select %p149, %s17, 0
        %s151 = smul.addr %s148, 2
        %s152 = sadd.s32 %s150, %s151
        %s153 = smul.addr %s152, 4
        %s154 = scalar_lea.vmem %s0, %s153
      $region28: #{_cic_forward_impl.3} parent=23 // pred_fallthru
        _
    $region24: #{_cic_forward_impl.3} parent=5 // pred_fallthru
      _
    %p155 = scmp.le.s32.totalorder 1, %s9
    %p156 = scmp.lt.s32.totalorder %s9, 3
    %p157 = pnand %p155, %p156
    %p158 = pneg %p157
    // Predicated region
    $region29: #{_cic_forward_impl.3} parent=5 // pred_check
      _
    $region30: #{_cic_forward_impl.3} parent=5 // pred_check_branch
      %160 = sbr.rel (%p157) target = $region32
    $region31: #{_cic_forward_impl.3} parent=5 // pred_region
      %s161 = ssub.s32 %s9, 1
      %p162 = scmp.lt.s32.totalorder %s18, 1
      %s163 = scalar_select %p162, %s18, 1
      %p164 = scmp.lt.s32.totalorder %s19, 0
      %s165 = scalar_select %p164, %s19, 0
      %s166 = smul.addr %s163, 2
      %s167 = sadd.s32 %s165, %s166
      %s168 = smul.addr %s167, 4
      %s169 = scalar_lea.vmem %s0, %s168
      %p170 = pneg %p49
      %p171 = pneg %p46
      %p172 = pneg %p70
      %p173 = pneg %p67
      %p174 = pneg %p91
      %p175 = pneg %p88
      %p176 = pneg %p119
      %p177 = pneg %p116
      %p178 = scmp.lt.s32.totalorder %s18, 1
      %s179 = scalar_select %p178, %s18, 1
      %p180 = scmp.lt.s32.totalorder %s19, 0
      %s181 = scalar_select %p180, %s19, 0
      %s182 = sadd.s32 %s181, %s179
      %s183 = smul.addr %s182, 4
      %s184 = scalar_lea.vmem %s3, %s183
      %p185 = scmp.lt.s32.totalorder %s18, 1
      %s186 = scalar_select %p185, %s18, 1
      %p187 = scmp.lt.s32.totalorder %s19, 0
      %s188 = scalar_select %p187, %s19, 0
      %s189 = smul.addr %s186, 2
      %s190 = sadd.s32 %s188, %s189
      %s191 = smul.addr %s190, 4
      %s192 = scalar_lea.vmem %s0, %s191
      %p193 = scmp.lt.s32.totalorder %s18, 1
      %s194 = scalar_select %p193, %s18, 1
      %p195 = scmp.lt.s32.totalorder %s19, 0
      %s196 = scalar_select %p195, %s19, 0
      %s197 = sadd.s32 %s196, %s194
      %s198 = smul.addr %s197, 4
      %s199 = scalar_lea.vmem %s3, %s198
      %v201 = vld [vmem:[%s1] sm:$0xf]
      %v202 = vld [vmem:[%s192] sm:$0xf]
      %v203 = vld [vmem:[%s192 + $0x4] sm:$0xf]
      %v204 = vld [vmem:[%s2] sm:$0xff]
      %206 = vset.pattern.permute.xlu0 0
      %207 = vperm.xlu0 %206, %v204
      %v208 = vpop.permute.xlu0 %207
      %v212 = vunpack.c.l.b16 %v202
      %v213 = vunpack.c.l.b16 %v203
      %v214 = vpack.c.b16 %v213, %v212
      %vm216 = vcmask 130048
      %v218 = vsel %vm216, %v201, 0
      %220 = vmatprep.subr.bf16.mxu0 0
      %221 = vmatpush1.bf16.msra.mxu0 0
      %222 = vmatprep.subr.bf16.mxu0 0
      %223 = vmatpush1.bf16.msra.mxu0 0
      %224 = vmatprep.subr.bf16.mxu0 0
      %225 = vmatpush1.bf16.msra.mxu0 0
      %226 = vmatprep.subr.bf16.mxu0 0
      %227 = vmatpush1.bf16.msra.mxu0 0
      %228 = vmatprep.subr.bf16.mxu0 0
      %229 = vmatpush1.bf16.msra.mxu0 0
      %230 = vmatprep.subr.bf16.mxu0 0
      %231 = vmatpush1.bf16.msra.mxu0 0
      %232 = vmatprep.subr.bf16.mxu0 0
      %233 = vmatpush1.bf16.msra.mxu0 0
      %234 = vmatprep.subr.bf16.mxu0 0
      %235 = vmatpush1.bf16.msra.mxu0 %v214
      %236 = vmatprep.subr.bf16.mxu0 0
      %237 = vmatpush2.bf16.msra.mxu0 0
      %238 = vmatprep.subr.bf16.mxu0 0
      %239 = vmatpush2.bf16.msra.mxu0 0
      %240 = vmatprep.subr.bf16.mxu0 0
      %241 = vmatpush2.bf16.msra.mxu0 0
      %242 = vmatprep.subr.bf16.mxu0 0
      %243 = vmatpush2.bf16.msra.mxu0 0
      %244 = vmatprep.subr.bf16.mxu0 0
      %245 = vmatpush2.bf16.msra.mxu0 0
      %246 = vmatprep.subr.bf16.mxu0 0
      %247 = vmatpush2.bf16.msra.mxu0 0
      %248 = vmatprep.subr.bf16.mxu0 0
      %249 = vmatpush2.bf16.msra.mxu0 0
      %250 = vmatprep.subr.bf16.mxu0 0
      %251 = vmatpush2.bf16.msra.mxu0 0
      %252 = vmatprep.mubr.bf16.mxu0 0
      %253 = vmatmul.mubr.bf16.gmra.mxu0 %v218
      %v254 = vpop.f32.mrf.mxu0
      %v255 = vadd.f32 %v208, %v254
      %v256 = vpop.f32.mrf.mxu0
      %v257 = vpop.f32.mrf.mxu0
      %v258 = vpop.f32.mrf.mxu0
      %259 = vdwg.mxu0
      %vm260 = vcmp.ge.f32.partialorder %v255, 0.0
      %v261 = vmul.f32 %v255, 0.2
      %v262 = vsel %vm260, %v255, %v261
      %v263 = vpack.c.bf16 %v262, %v262
      %264 = vst [vmem:[%s199] sm:$0xf] %v263
      %p265 = scmp.lt.s32.totalorder %s18, 1
      %s266 = scalar_select %p265, %s18, 1
      %p267 = scmp.lt.s32.totalorder %s19, 0
      %s268 = scalar_select %p267, %s19, 0
      %s269 = sadd.s32 %s268, %s266
      %s270 = smul.addr %s269, 4
      %s271 = scalar_lea.vmem %s3, %s270
      // Predicated region
      $region33: #{_cic_forward_impl.3} parent=31 // pred_check
        %p272 = pneg %p116
      $region34: #{_cic_forward_impl.3} parent=31 // pred_check_branch
        %274 = sbr.rel (%p272) target = $region36
      $region35: #{_cic_forward_impl.3} parent=31 // pred_region
        _
      $region36: #{_cic_forward_impl.3} parent=31 // pred_fallthru
        _
    $region32: #{_cic_forward_impl.3} parent=5 // pred_fallthru
      _
    %p275 = scmp.le.s32.totalorder 2, %s9
    // Predicated region
    $region37: #{_cic_forward_impl.3} parent=5 // pred_check
      %p276 = pneg %p275
    $region38: #{_cic_forward_impl.3} parent=5 // pred_check_branch
      %278 = sbr.rel (%p276) target = $region40
    $region39: #{_cic_forward_impl.3} parent=5 // pred_region
      %s279 = ssub.s32 %s9, 2
      // Predicated region
      $region41: #{_cic_forward_impl.3} parent=39 // pred_check
        %p280 = pneg %p122
      $region42: #{_cic_forward_impl.3} parent=39 // pred_check_branch
        %282 = sbr.rel (%p280) target = $region44
      $region43: #{_cic_forward_impl.3} parent=39 // pred_region
        %p283 = scmp.lt.s32.totalorder %s20, 1
        %s284 = scalar_select %p283, %s20, 1
        %p285 = scmp.lt.s32.totalorder %s21, 0
        %s286 = scalar_select %p285, %s21, 0
        %s287 = sadd.s32 %s286, %s284
        %s288 = smul.addr %s287, 4
        %s289 = scalar_lea.vmem %s3, %s288
      $region44: #{_cic_forward_impl.3} parent=39 // pred_fallthru
        _
    $region40: #{_cic_forward_impl.3} parent=5 // pred_fallthru
      _
  $region6: #{_cic_forward_impl.3} parent=0 // loop_footer
    %s13 = sadd.s32 1, %s9
  $region7: #{_cic_forward_impl.3} parent=0 // loop_footer_branch
    %8 = sbr.rel target = $region3
  $region8: #{_cic_forward_impl.3} parent=0 // loop_exit
    _

// kernel: _cic_forward_impl.5
$region0: #{_cic_forward_impl.5}
  #allocation0 [shape = 'u32[]', space=smem, size = 0x4, offset = 0x4, fixed_abs, tag = 'smem constant byte address 0x4 - core index']
  #allocation1 [shape = 'u32[144,128]{1,0:T(1,128)}', space=vmem, size = 0x12000, scoped, tag = 'internal scratch']
  #allocation2 [shape = 'f32[8,128]{1,0:T(8,128)}', space=vmem, size = 0x1000, scoped, tag = 'scratch operand']
  #allocation3 [shape = 'f32[8,128]{1,0:T(8,128)}', space=vmem, size = 0x1000, scoped, tag = 'scratch operand']
  %s0 = inlined_call_operand.vmem [shape: f32[2,8,128], index: 0, kind: input, shape index: {}]
  %s1 = inlined_call_operand.vmem [shape: f32[2,8,1024], index: 1, kind: input, shape index: {}]
  %s2 = inlined_call_operand.vmem [shape: bf16[2,8,128], index: 2, kind: input, shape index: {}]
  %s3 = inlined_call_operand.vmem [shape: bf16[2,8,1024], index: 3, kind: input, shape index: {}]
  %s4 = inlined_call_operand.vmem [shape: bf16[2,16,128], index: 4, kind: input, shape index: {}]
  %s5 = inlined_call_operand.vmem [shape: f32[8,8], index: 5, kind: input, shape index: {}]
  %s6 = inlined_call_operand.vmem [shape: f32[8,8], index: 6, kind: input, shape index: {}]
  %s7 = inlined_call_operand.vmem [shape: f32[8,1], index: 7, kind: input, shape index: {}]
  %s8 = inlined_call_operand.vmem [shape: bf16[8,8], index: 8, kind: input, shape index: {}]
  %s9 = inlined_call_operand.vmem [shape: f32[8,1], index: 9, kind: input, shape index: {}]
  %s10 = inlined_call_operand.vmem [shape: bf16[8,8], index: 10, kind: input, shape index: {}]
  %s11 = inlined_call_operand.vmem [shape: f32[8,1], index: 11, kind: input, shape index: {}]
  %s12 = inlined_call_operand.vmem [shape: bf16[32,8], index: 12, kind: input, shape index: {}]
  %s13 = inlined_call_operand.vmem [shape: bf16[32,16], index: 13, kind: input, shape index: {}]
  %s14 = inlined_call_operand.vmem [shape: f32[32,1], index: 14, kind: input, shape index: {}]
  %s15 = inlined_call_operand.vmem [shape: f32[2,32,128], index: 15, kind: output, shape index: {}]
  %s16 = sld [smem:[#allocation0]]
  $region101: #{_cic_forward_impl.5} parent=0
    _
  %s18 = ssub.s32 1, %s16
  %s19 = scalar_select 0, %s18, %s16
  loop: start=0, step=1, limit=18
  $region2: #{_cic_forward_impl.5} parent=0 // loop_pre_header
    _
  $region3: #{_cic_forward_impl.5} parent=0 // loop_header
    %s21 = sphi 0, %s25
    %p22 = scmp.ge.s32.totalorder %s21, 18
    %s28 = sphi 0, %s47
    %s29 = sphi 0, %s43
    %s30 = sphi 0, %s39
    %s31 = sphi 0, %s28
    %s32 = sphi 0, %s29
    %s33 = sphi 0, %s30
    %s34 = sphi 0, %s31
    %s35 = sphi 0, %s32
    %s36 = sphi 0, %s33
    %s52 = sphi 0, %s54
    %s55 = sphi 0, %s52
    %s56 = sphi 0, %s55
    %s72 = sphi 0, %s56
    %s82 = sphi 0, %s84
    %s85 = sphi 0, %s82
    %s86 = sphi 0, %s85
    %s102 = sphi 0, %s86
    %s110 = sphi 0, %s112
    %s113 = sphi 0, %s110
    %s114 = sphi 0, %s113
    %s130 = sphi 0, %s114
    %s140 = sphi 0, %s142
    %s143 = sphi 0, %s140
    %s144 = sphi 0, %s143
    %s160 = sphi 0, %s144
    %s168 = sphi 0, %s170
    %s171 = sphi 0, %s168
    %s172 = sphi 0, %s171
    %s188 = sphi 0, %s172
    %s192 = sphi 0, %s192
    %s194 = sphi 0, %s192
    %s195 = sphi 0, %s194
    %s209 = sphi 0, %s195
    %s213 = sphi 0, %s213
    %s215 = sphi 0, %s213
    %s216 = sphi 0, %s215
    %s230 = sphi 0, %s216
    %s234 = sphi 0, %s234
    %s236 = sphi 0, %s234
    %s237 = sphi 0, %s236
    %s251 = sphi 0, %s237
    %s255 = sphi 0, %s255
    %s257 = sphi 0, %s255
    %s258 = sphi 0, %s257
    %s272 = sphi 0, %s258
    %s276 = sphi 0, %s276
    %s278 = sphi 0, %s276
    %s279 = sphi 0, %s278
    %s293 = sphi 0, %s279
    %s297 = sphi 0, %s297
    %s299 = sphi 0, %s297
    %s300 = sphi 0, %s299
    %s314 = sphi 0, %s300
    %s318 = sphi 0, %s318
    %s320 = sphi 0, %s318
    %s321 = sphi 0, %s320
    %s335 = sphi 0, %s321
    %s339 = sphi 0, %s339
    %s341 = sphi 0, %s339
    %s342 = sphi 0, %s341
    %s356 = sphi 0, %s342
    %s360 = sphi 0, %s360
    %s362 = sphi 0, %s360
    %s363 = sphi 0, %s362
    %s377 = sphi 0, %s363
    %s381 = sphi 0, %s381
    %s383 = sphi 0, %s381
    %s384 = sphi 0, %s383
    %s398 = sphi 0, %s384
    %s406 = sphi 0, %s408
    %s409 = sphi 0, %s406
    %s410 = sphi 0, %s409
    %s426 = sphi 0, %s410
  $region4: #{_cic_forward_impl.5} parent=0 // loop_header_branch
    %24 = sbr.rel (%p22) target = $region8
  $region5: #{_cic_forward_impl.5} parent=0 // loop_body
    %s26 = ssub.s32 %s21, 1
    %s27 = ssub.s32 %s21, 2
    %s37 = sadd.s32 1, %s30
    %p38 = scmp.ge.s32.totalorder %s37, 8
    %s39 = scalar_select %p38, 0, %s37
    %s40 = sadd.s32 1, %s29
    %s41 = scalar_select %p38, %s40, %s29
    %p42 = scmp.ge.s32.totalorder %s41, 1
    %s43 = scalar_select %p42, 0, %s41
    %s44 = sadd.s32 1, %s28
    %s45 = scalar_select %p42, %s44, %s28
    %p46 = scmp.ge.s32.totalorder %s45, 2
    %s47 = scalar_select %p46, 0, %s45
    %s48 = ssub.s32 %s28, %s47
    %s49 = ssub.s32 %s29, %s43
    %s50 = sor.u32 %s48, %s49
    %p51 = scmp.eq.s32.totalorder %s50, 0
    %s53 = sadd.s32 %s52, 1
    %s54 = scalar_select %p51, %s52, %s53
    %p57 = pneg %p51
    %p58 = scmp.eq.s32.totalorder %s21, 15
    %p59 = por %p57, %p58
    %p60 = scmp.ne.s32.totalorder %s52, %s55
    %p61 = scmp.eq.s32.totalorder %s21, 0
    %p62 = por %p60, %p61
    %p63 = scmp.ne.s32.totalorder %s52, %s55
    %p64 = scmp.eq.s32.totalorder %s26, 15
    %p65 = por %p63, %p64
    %p66 = scmp.ne.s32.totalorder %s55, %s56
    %p67 = scmp.eq.s32.totalorder %s26, 0
    %p68 = por %p66, %p67
    %p69 = scmp.ne.s32.totalorder %s55, %s56
    %p70 = scmp.eq.s32.totalorder %s27, 15
    %p71 = por %p69, %p70
    %p73 = scmp.ne.s32.totalorder %s56, %s72
    %p74 = scmp.eq.s32.totalorder %s27, 0
    %p75 = por %p73, %p74
    %s76 = sadd.s32 %s30, %s29
    %s77 = sadd.s32 %s39, %s43
    %s78 = ssub.s32 %s28, %s47
    %s79 = ssub.s32 %s76, %s77
    %s80 = sor.u32 %s78, %s79
    %p81 = scmp.eq.s32.totalorder %s80, 0
    %s83 = sadd.s32 %s82, 1
    %s84 = scalar_select %p81, %s82, %s83
    %p87 = pneg %p81
    %p88 = scmp.eq.s32.totalorder %s21, 15
    %p89 = por %p87, %p88
    %p90 = scmp.ne.s32.totalorder %s82, %s85
    %p91 = scmp.eq.s32.totalorder %s21, 0
    %p92 = por %p90, %p91
    %p93 = scmp.ne.s32.totalorder %s82, %s85
    %p94 = scmp.eq.s32.totalorder %s26, 15
    %p95 = por %p93, %p94
    %p96 = scmp.ne.s32.totalorder %s85, %s86
    %p97 = scmp.eq.s32.totalorder %s26, 0
    %p98 = por %p96, %p97
    %p99 = scmp.ne.s32.totalorder %s85, %s86
    %p100 = scmp.eq.s32.totalorder %s27, 15
    %p101 = por %p99, %p100
    %p103 = scmp.ne.s32.totalorder %s86, %s102
    %p104 = scmp.eq.s32.totalorder %s27, 0
    %p105 = por %p103, %p104
    %s106 = ssub.s32 %s28, %s47
    %s107 = ssub.s32 %s29, %s43
    %s108 = sor.u32 %s106, %s107
    %p109 = scmp.eq.s32.totalorder %s108, 0
    %s111 = sadd.s32 %s110, 1
    %s112 = scalar_select %p109, %s110, %s111
    %p115 = pneg %p109
    %p116 = scmp.eq.s32.totalorder %s21, 15
    %p117 = por %p115, %p116
    %p118 = scmp.ne.s32.totalorder %s110, %s113
    %p119 = scmp.eq.s32.totalorder %s21, 0
    %p120 = por %p118, %p119
    %p121 = scmp.ne.s32.totalorder %s110, %s113
    %p122 = scmp.eq.s32.totalorder %s26, 15
    %p123 = por %p121, %p122
    %p124 = scmp.ne.s32.totalorder %s113, %s114
    %p125 = scmp.eq.s32.totalorder %s26, 0
    %p126 = por %p124, %p125
    %p127 = scmp.ne.s32.totalorder %s113, %s114
    %p128 = scmp.eq.s32.totalorder %s27, 15
    %p129 = por %p127, %p128
    %p131 = scmp.ne.s32.totalorder %s114, %s130
    %p132 = scmp.eq.s32.totalorder %s27, 0
    %p133 = por %p131, %p132
    %s134 = sadd.s32 %s30, %s29
    %s135 = sadd.s32 %s39, %s43
    %s136 = ssub.s32 %s28, %s47
    %s137 = ssub.s32 %s134, %s135
    %s138 = sor.u32 %s136, %s137
    %p139 = scmp.eq.s32.totalorder %s138, 0
    %s141 = sadd.s32 %s140, 1
    %s142 = scalar_select %p139, %s140, %s141
    %p145 = pneg %p139
    %p146 = scmp.eq.s32.totalorder %s21, 15
    %p147 = por %p145, %p146
    %p148 = scmp.ne.s32.totalorder %s140, %s143
    %p149 = scmp.eq.s32.totalorder %s21, 0
    %p150 = por %p148, %p149
    %p151 = scmp.ne.s32.totalorder %s140, %s143
    %p152 = scmp.eq.s32.totalorder %s26, 15
    %p153 = por %p151, %p152
    %p154 = scmp.ne.s32.totalorder %s143, %s144
    %p155 = scmp.eq.s32.totalorder %s26, 0
    %p156 = por %p154, %p155
    %p157 = scmp.ne.s32.totalorder %s143, %s144
    %p158 = scmp.eq.s32.totalorder %s27, 15
    %p159 = por %p157, %p158
    %p161 = scmp.ne.s32.totalorder %s144, %s160
    %p162 = scmp.eq.s32.totalorder %s27, 0
    %p163 = por %p161, %p162
    %s164 = ssub.s32 %s28, %s47
    %s165 = ssub.s32 %s29, %s43
    %s166 = sor.u32 %s164, %s165
    %p167 = scmp.eq.s32.totalorder %s166, 0
    %s169 = sadd.s32 %s168, 1
    %s170 = scalar_select %p167, %s168, %s169
    %p173 = pneg %p167
    %p174 = scmp.eq.s32.totalorder %s21, 15
    %p175 = por %p173, %p174
    %p176 = scmp.ne.s32.totalorder %s168, %s171
    %p177 = scmp.eq.s32.totalorder %s21, 0
    %p178 = por %p176, %p177
    %p179 = scmp.ne.s32.totalorder %s168, %s171
    %p180 = scmp.eq.s32.totalorder %s26, 15
    %p181 = por %p179, %p180
    %p182 = scmp.ne.s32.totalorder %s171, %s172
    %p183 = scmp.eq.s32.totalorder %s26, 0
    %p184 = por %p182, %p183
    %p185 = scmp.ne.s32.totalorder %s171, %s172
    %p186 = scmp.eq.s32.totalorder %s27, 15
    %p187 = por %p185, %p186
    %p189 = scmp.ne.s32.totalorder %s172, %s188
    %p190 = scmp.eq.s32.totalorder %s27, 0
    %p191 = por %p189, %p190
    %s193 = sadd.s32 %s192, 1
    %p196 = scmp.eq.s32.totalorder %s21, 15
    %p197 = scmp.ne.s32.totalorder %s192, %s194
    %p198 = scmp.eq.s32.totalorder %s21, 0
    %p199 = por %p197, %p198
    %p200 = scmp.ne.s32.totalorder %s192, %s194
    %p201 = scmp.eq.s32.totalorder %s26, 15
    %p202 = por %p200, %p201
    %p203 = scmp.ne.s32.totalorder %s194, %s195
    %p204 = scmp.eq.s32.totalorder %s26, 0
    %p205 = por %p203, %p204
    %p206 = scmp.ne.s32.totalorder %s194, %s195
    %p207 = scmp.eq.s32.totalorder %s27, 15
    %p208 = por %p206, %p207
    %p210 = scmp.ne.s32.totalorder %s195, %s209
    %p211 = scmp.eq.s32.totalorder %s27, 0
    %p212 = por %p210, %p211
    %s214 = sadd.s32 %s213, 1
    %p217 = scmp.eq.s32.totalorder %s21, 15
    %p218 = scmp.ne.s32.totalorder %s213, %s215
    %p219 = scmp.eq.s32.totalorder %s21, 0
    %p220 = por %p218, %p219
    %p221 = scmp.ne.s32.totalorder %s213, %s215
    %p222 = scmp.eq.s32.totalorder %s26, 15
    %p223 = por %p221, %p222
    %p224 = scmp.ne.s32.totalorder %s215, %s216
    %p225 = scmp.eq.s32.totalorder %s26, 0
    %p226 = por %p224, %p225
    %p227 = scmp.ne.s32.totalorder %s215, %s216
    %p228 = scmp.eq.s32.totalorder %s27, 15
    %p229 = por %p227, %p228
    %p231 = scmp.ne.s32.totalorder %s216, %s230
    %p232 = scmp.eq.s32.totalorder %s27, 0
    %p233 = por %p231, %p232
    %s235 = sadd.s32 %s234, 1
    %p238 = scmp.eq.s32.totalorder %s21, 15
    %p239 = scmp.ne.s32.totalorder %s234, %s236
    %p240 = scmp.eq.s32.totalorder %s21, 0
    %p241 = por %p239, %p240
    %p242 = scmp.ne.s32.totalorder %s234, %s236
    %p243 = scmp.eq.s32.totalorder %s26, 15
    %p244 = por %p242, %p243
    %p245 = scmp.ne.s32.totalorder %s236, %s237
    %p246 = scmp.eq.s32.totalorder %s26, 0
    %p247 = por %p245, %p246
    %p248 = scmp.ne.s32.totalorder %s236, %s237
    %p249 = scmp.eq.s32.totalorder %s27, 15
    %p250 = por %p248, %p249
    %p252 = scmp.ne.s32.totalorder %s237, %s251
    %p253 = scmp.eq.s32.totalorder %s27, 0
    %p254 = por %p252, %p253
    %s256 = sadd.s32 %s255, 1
    %p259 = scmp.eq.s32.totalorder %s21, 15
    %p260 = scmp.ne.s32.totalorder %s255, %s257
    %p261 = scmp.eq.s32.totalorder %s21, 0
    %p262 = por %p260, %p261
    %p263 = scmp.ne.s32.totalorder %s255, %s257
    %p264 = scmp.eq.s32.totalorder %s26, 15
    %p265 = por %p263, %p264
    %p266 = scmp.ne.s32.totalorder %s257, %s258
    %p267 = scmp.eq.s32.totalorder %s26, 0
    %p268 = por %p266, %p267
    %p269 = scmp.ne.s32.totalorder %s257, %s258
    %p270 = scmp.eq.s32.totalorder %s27, 15
    %p271 = por %p269, %p270
    %p273 = scmp.ne.s32.totalorder %s258, %s272
    %p274 = scmp.eq.s32.totalorder %s27, 0
    %p275 = por %p273, %p274
    %s277 = sadd.s32 %s276, 1
    %p280 = scmp.eq.s32.totalorder %s21, 15
    %p281 = scmp.ne.s32.totalorder %s276, %s278
    %p282 = scmp.eq.s32.totalorder %s21, 0
    %p283 = por %p281, %p282
    %p284 = scmp.ne.s32.totalorder %s276, %s278
    %p285 = scmp.eq.s32.totalorder %s26, 15
    %p286 = por %p284, %p285
    %p287 = scmp.ne.s32.totalorder %s278, %s279
    %p288 = scmp.eq.s32.totalorder %s26, 0
    %p289 = por %p287, %p288
    %p290 = scmp.ne.s32.totalorder %s278, %s279
    %p291 = scmp.eq.s32.totalorder %s27, 15
    %p292 = por %p290, %p291
    %p294 = scmp.ne.s32.totalorder %s279, %s293
    %p295 = scmp.eq.s32.totalorder %s27, 0
    %p296 = por %p294, %p295
    %s298 = sadd.s32 %s297, 1
    %p301 = scmp.eq.s32.totalorder %s21, 15
    %p302 = scmp.ne.s32.totalorder %s297, %s299
    %p303 = scmp.eq.s32.totalorder %s21, 0
    %p304 = por %p302, %p303
    %p305 = scmp.ne.s32.totalorder %s297, %s299
    %p306 = scmp.eq.s32.totalorder %s26, 15
    %p307 = por %p305, %p306
    %p308 = scmp.ne.s32.totalorder %s299, %s300
    %p309 = scmp.eq.s32.totalorder %s26, 0
    %p310 = por %p308, %p309
    %p311 = scmp.ne.s32.totalorder %s299, %s300
    %p312 = scmp.eq.s32.totalorder %s27, 15
    %p313 = por %p311, %p312
    %p315 = scmp.ne.s32.totalorder %s300, %s314
    %p316 = scmp.eq.s32.totalorder %s27, 0
    %p317 = por %p315, %p316
    %s319 = sadd.s32 %s318, 1
    %p322 = scmp.eq.s32.totalorder %s21, 15
    %p323 = scmp.ne.s32.totalorder %s318, %s320
    %p324 = scmp.eq.s32.totalorder %s21, 0
    %p325 = por %p323, %p324
    %p326 = scmp.ne.s32.totalorder %s318, %s320
    %p327 = scmp.eq.s32.totalorder %s26, 15
    %p328 = por %p326, %p327
    %p329 = scmp.ne.s32.totalorder %s320, %s321
    %p330 = scmp.eq.s32.totalorder %s26, 0
    %p331 = por %p329, %p330
    %p332 = scmp.ne.s32.totalorder %s320, %s321
    %p333 = scmp.eq.s32.totalorder %s27, 15
    %p334 = por %p332, %p333
    %p336 = scmp.ne.s32.totalorder %s321, %s335
    %p337 = scmp.eq.s32.totalorder %s27, 0
    %p338 = por %p336, %p337
    %s340 = sadd.s32 %s339, 1
    %p343 = scmp.eq.s32.totalorder %s21, 15
    %p344 = scmp.ne.s32.totalorder %s339, %s341
    %p345 = scmp.eq.s32.totalorder %s21, 0
    %p346 = por %p344, %p345
    %p347 = scmp.ne.s32.totalorder %s339, %s341
    %p348 = scmp.eq.s32.totalorder %s26, 15
    %p349 = por %p347, %p348
    %p350 = scmp.ne.s32.totalorder %s341, %s342
    %p351 = scmp.eq.s32.totalorder %s26, 0
    %p352 = por %p350, %p351
    %p353 = scmp.ne.s32.totalorder %s341, %s342
    %p354 = scmp.eq.s32.totalorder %s27, 15
    %p355 = por %p353, %p354
    %p357 = scmp.ne.s32.totalorder %s342, %s356
    %p358 = scmp.eq.s32.totalorder %s27, 0
    %p359 = por %p357, %p358
    %s361 = sadd.s32 %s360, 1
    %p364 = scmp.eq.s32.totalorder %s21, 15
    %p365 = scmp.ne.s32.totalorder %s360, %s362
    %p366 = scmp.eq.s32.totalorder %s21, 0
    %p367 = por %p365, %p366
    %p368 = scmp.ne.s32.totalorder %s360, %s362
    %p369 = scmp.eq.s32.totalorder %s26, 15
    %p370 = por %p368, %p369
    %p371 = scmp.ne.s32.totalorder %s362, %s363
    %p372 = scmp.eq.s32.totalorder %s26, 0
    %p373 = por %p371, %p372
    %p374 = scmp.ne.s32.totalorder %s362, %s363
    %p375 = scmp.eq.s32.totalorder %s27, 15
    %p376 = por %p374, %p375
    %p378 = scmp.ne.s32.totalorder %s363, %s377
    %p379 = scmp.eq.s32.totalorder %s27, 0
    %p380 = por %p378, %p379
    %s382 = sadd.s32 %s381, 1
    %p385 = scmp.eq.s32.totalorder %s21, 15
    %p386 = scmp.ne.s32.totalorder %s381, %s383
    %p387 = scmp.eq.s32.totalorder %s21, 0
    %p388 = por %p386, %p387
    %p389 = scmp.ne.s32.totalorder %s381, %s383
    %p390 = scmp.eq.s32.totalorder %s26, 15
    %p391 = por %p389, %p390
    %p392 = scmp.ne.s32.totalorder %s383, %s384
    %p393 = scmp.eq.s32.totalorder %s26, 0
    %p394 = por %p392, %p393
    %p395 = scmp.ne.s32.totalorder %s383, %s384
    %p396 = scmp.eq.s32.totalorder %s27, 15
    %p397 = por %p395, %p396
    %p399 = scmp.ne.s32.totalorder %s384, %s398
    %p400 = scmp.eq.s32.totalorder %s27, 0
    %p401 = por %p399, %p400
    %s402 = ssub.s32 %s28, %s47
    %s403 = ssub.s32 %s29, %s43
    %s404 = sor.u32 %s402, %s403
    %p405 = scmp.eq.s32.totalorder %s404, 0
    %s407 = sadd.s32 %s406, 1
    %s408 = scalar_select %p405, %s406, %s407
    %p411 = pneg %p405
    %p412 = scmp.eq.s32.totalorder %s21, 15
    %p413 = por %p411, %p412
    %p414 = scmp.ne.s32.totalorder %s406, %s409
    %p415 = scmp.eq.s32.totalorder %s21, 0
    %p416 = por %p414, %p415
    %p417 = scmp.ne.s32.totalorder %s406, %s409
    %p418 = scmp.eq.s32.totalorder %s26, 15
    %p419 = por %p417, %p418
    %p420 = scmp.ne.s32.totalorder %s409, %s410
    %p421 = scmp.eq.s32.totalorder %s26, 0
    %p422 = por %p420, %p421
    %p423 = scmp.ne.s32.totalorder %s409, %s410
    %p424 = scmp.eq.s32.totalorder %s27, 15
    %p425 = por %p423, %p424
    %p427 = scmp.ne.s32.totalorder %s410, %s426
    %p428 = scmp.eq.s32.totalorder %s27, 0
    %p429 = por %p427, %p428
    %p430 = scmp.le.s32.totalorder 1, %s21
    %p431 = scmp.lt.s32.totalorder %s21, 17
    %p432 = pnand %p430, %p431
    %p433 = pneg %p432
    // Predicated region
    $region9: #{_cic_forward_impl.5} parent=5 // pred_check
      _
    $region10: #{_cic_forward_impl.5} parent=5 // pred_check_branch
      %435 = sbr.rel (%p432) target = $region12
    $region11: #{_cic_forward_impl.5} parent=5 // pred_region
      %s436 = ssub.s32 %s21, 1
      // Predicated region
      $region13: #{_cic_forward_impl.5} parent=11 // pred_check
        %p437 = pneg %p205
      $region14: #{_cic_forward_impl.5} parent=11 // pred_check_branch
        %439 = sbr.rel (%p437) target = $region16
      $region15: #{_cic_forward_impl.5} parent=11 // pred_region
        _
      $region16: #{_cic_forward_impl.5} parent=11 // pred_fallthru
        _
      // Predicated region
      $region17: #{_cic_forward_impl.5} parent=11 // pred_check
        %p440 = pneg %p226
      $region18: #{_cic_forward_impl.5} parent=11 // pred_check_branch
        %442 = sbr.rel (%p440) target = $region20
      $region19: #{_cic_forward_impl.5} parent=11 // pred_region
        _
      $region20: #{_cic_forward_impl.5} parent=11 // pred_fallthru
        _
      // Predicated region
      $region21: #{_cic_forward_impl.5} parent=11 // pred_check
        %p443 = pneg %p247
      $region22: #{_cic_forward_impl.5} parent=11 // pred_check_branch
        %445 = sbr.rel (%p443) target = $region24
      $region23: #{_cic_forward_impl.5} parent=11 // pred_region
        _
      $region24: #{_cic_forward_impl.5} parent=11 // pred_fallthru
        _
      // Predicated region
      $region25: #{_cic_forward_impl.5} parent=11 // pred_check
        %p446 = pneg %p268
      $region26: #{_cic_forward_impl.5} parent=11 // pred_check_branch
        %448 = sbr.rel (%p446) target = $region28
      $region27: #{_cic_forward_impl.5} parent=11 // pred_region
        _
      $region28: #{_cic_forward_impl.5} parent=11 // pred_fallthru
        _
      // Predicated region
      $region29: #{_cic_forward_impl.5} parent=11 // pred_check
        %p449 = pneg %p289
      $region30: #{_cic_forward_impl.5} parent=11 // pred_check_branch
        %451 = sbr.rel (%p449) target = $region32
      $region31: #{_cic_forward_impl.5} parent=11 // pred_region
        _
      $region32: #{_cic_forward_impl.5} parent=11 // pred_fallthru
        _
      // Predicated region
      $region33: #{_cic_forward_impl.5} parent=11 // pred_check
        %p452 = pneg %p310
      $region34: #{_cic_forward_impl.5} parent=11 // pred_check_branch
        %454 = sbr.rel (%p452) target = $region36
      $region35: #{_cic_forward_impl.5} parent=11 // pred_region
        _
      $region36: #{_cic_forward_impl.5} parent=11 // pred_fallthru
        _
      // Predicated region
      $region37: #{_cic_forward_impl.5} parent=11 // pred_check
        %p455 = pneg %p331
      $region38: #{_cic_forward_impl.5} parent=11 // pred_check_branch
        %457 = sbr.rel (%p455) target = $region40
      $region39: #{_cic_forward_impl.5} parent=11 // pred_region
        _
      $region40: #{_cic_forward_impl.5} parent=11 // pred_fallthru
        _
      // Predicated region
      $region41: #{_cic_forward_impl.5} parent=11 // pred_check
        %p458 = pneg %p352
      $region42: #{_cic_forward_impl.5} parent=11 // pred_check_branch
        %460 = sbr.rel (%p458) target = $region44
      $region43: #{_cic_forward_impl.5} parent=11 // pred_region
        _
      $region44: #{_cic_forward_impl.5} parent=11 // pred_fallthru
        _
      // Predicated region
      $region45: #{_cic_forward_impl.5} parent=11 // pred_check
        %p461 = pneg %p373
      $region46: #{_cic_forward_impl.5} parent=11 // pred_check_branch
        %463 = sbr.rel (%p461) target = $region48
      $region47: #{_cic_forward_impl.5} parent=11 // pred_region
        _
      $region48: #{_cic_forward_impl.5} parent=11 // pred_fallthru
        _
      // Predicated region
      $region49: #{_cic_forward_impl.5} parent=11 // pred_check
        %p464 = pneg %p394
      $region50: #{_cic_forward_impl.5} parent=11 // pred_check_branch
        %466 = sbr.rel (%p464) target = $region52
      $region51: #{_cic_forward_impl.5} parent=11 // pred_region
        _
      $region52: #{_cic_forward_impl.5} parent=11 // pred_fallthru
        _
    $region12: #{_cic_forward_impl.5} parent=5 // pred_fallthru
      _
    %p467 = scmp.lt.s32.totalorder %s21, 16
    // Predicated region
    $region53: #{_cic_forward_impl.5} parent=5 // pred_check
      %p468 = pneg %p467
    $region54: #{_cic_forward_impl.5} parent=5 // pred_check_branch
      %470 = sbr.rel (%p468) target = $region56
    $region55: #{_cic_forward_impl.5} parent=5 // pred_region
      // Predicated region
      $region57: #{_cic_forward_impl.5} parent=55 // pred_check
        %p471 = pneg %p62
      $region58: #{_cic_forward_impl.5} parent=55 // pred_check_branch
        %473 = sbr.rel (%p471) target = $region60
      $region59: #{_cic_forward_impl.5} parent=55 // pred_region
        %p474 = scmp.lt.s32.totalorder %s28, 1
        %s475 = scalar_select %p474, %s28, 1
        %p476 = scmp.lt.s32.totalorder %s29, 0
        %s477 = scalar_select %p476, %s29, 0
        %s478 = sadd.s32 %s477, %s475
        %s479 = smul.addr %s478, 8
        %s480 = scalar_lea.vmem %s0, %s479
      $region60: #{_cic_forward_impl.5} parent=55 // pred_fallthru
        _
      // Predicated region
      $region61: #{_cic_forward_impl.5} parent=55 // pred_check
        %p481 = pneg %p92
      $region62: #{_cic_forward_impl.5} parent=55 // pred_check_branch
        %483 = sbr.rel (%p481) target = $region64
      $region63: #{_cic_forward_impl.5} parent=55 // pred_region
        %s484 = sadd.s32 %s30, %s29
        %p485 = scmp.lt.s32.totalorder %s28, 1
        %s486 = scalar_select %p485, %s28, 1
        %p487 = scmp.lt.s32.totalorder %s484, 7
        %s488 = scalar_select %p487, %s484, 7
        %s489 = smul.addr %s486, 8
        %s490 = sadd.s32 %s488, %s489
        %s491 = smul.addr %s490, 8
        %s492 = scalar_lea.vmem %s1, %s491
        %s493 = sadd.s32 %s30, %s29
      $region64: #{_cic_forward_impl.5} parent=55 // pred_fallthru
        _
      // Predicated region
      $region65: #{_cic_forward_impl.5} parent=55 // pred_check
        %p494 = pneg %p120
      $region66: #{_cic_forward_impl.5} parent=55 // pred_check_branch
        %496 = sbr.rel (%p494) target = $region68
      $region67: #{_cic_forward_impl.5} parent=55 // pred_region
        %p497 = scmp.lt.s32.totalorder %s28, 1
        %s498 = scalar_select %p497, %s28, 1
        %p499 = scmp.lt.s32.totalorder %s29, 0
        %s500 = scalar_select %p499, %s29, 0
        %s501 = sadd.s32 %s500, %s498
        %s502 = smul.addr %s501, 4
        %s503 = scalar_lea.vmem %s2, %s502
      $region68: #{_cic_forward_impl.5} parent=55 // pred_fallthru
        _
      // Predicated region
      $region69: #{_cic_forward_impl.5} parent=55 // pred_check
        %p504 = pneg %p150
      $region70: #{_cic_forward_impl.5} parent=55 // pred_check_branch
        %506 = sbr.rel (%p504) target = $region72
      $region71: #{_cic_forward_impl.5} parent=55 // pred_region
        %s507 = sadd.s32 %s30, %s29
        %p508 = scmp.lt.s32.totalorder %s28, 1
        %s509 = scalar_select %p508, %s28, 1
        %p510 = scmp.lt.s32.totalorder %s507, 7
        %s511 = scalar_select %p510, %s507, 7
        %s512 = smul.addr %s509, 8
        %s513 = sadd.s32 %s511, %s512
        %s514 = smul.addr %s513, 4
        %s515 = scalar_lea.vmem %s3, %s514
        %s516 = sadd.s32 %s30, %s29
      $region72: #{_cic_forward_impl.5} parent=55 // pred_fallthru
        _
      // Predicated region
      $region73: #{_cic_forward_impl.5} parent=55 // pred_check
        %p517 = pneg %p178
      $region74: #{_cic_forward_impl.5} parent=55 // pred_check_branch
        %519 = sbr.rel (%p517) target = $region76
      $region75: #{_cic_forward_impl.5} parent=55 // pred_region
        %p520 = scmp.lt.s32.totalorder %s28, 1
        %s521 = scalar_select %p520, %s28, 1
        %p522 = scmp.lt.s32.totalorder %s29, 0
        %s523 = scalar_select %p522, %s29, 0
        %s524 = smul.addr %s521, 2
        %s525 = sadd.s32 %s523, %s524
        %s526 = smul.addr %s525, 4
        %s527 = scalar_lea.vmem %s4, %s526
      $region76: #{_cic_forward_impl.5} parent=55 // pred_fallthru
        _
    $region56: #{_cic_forward_impl.5} parent=5 // pred_fallthru
      _
    %p528 = scmp.le.s32.totalorder 1, %s21
    %p529 = scmp.lt.s32.totalorder %s21, 17
    %p530 = pnand %p528, %p529
    %p531 = pneg %p530
    // Predicated region
    $region77: #{_cic_forward_impl.5} parent=5 // pred_check
      _
    $region78: #{_cic_forward_impl.5} parent=5 // pred_check_branch
      %533 = sbr.rel (%p530) target = $region80
    $region79: #{_cic_forward_impl.5} parent=5 // pred_region
      %s534 = ssub.s32 %s21, 1
      %p535 = scmp.lt.s32.totalorder %s31, 1
      %s536 = scalar_select %p535, %s31, 1
      %p537 = scmp.lt.s32.totalorder %s32, 0
      %s538 = scalar_select %p537, %s32, 0
      %s539 = sadd.s32 %s538, %s536
      %s540 = smul.addr %s539, 8
      %s541 = scalar_lea.vmem %s0, %s540
      %p542 = pneg %p68
      %p543 = pneg %p65
      %s544 = sadd.s32 %s33, %s32
      %p545 = scmp.lt.s32.totalorder %s31, 1
      %s546 = scalar_select %p545, %s31, 1
      %p547 = scmp.lt.s32.totalorder %s544, 7
      %s548 = scalar_select %p547, %s544, 7
      %s549 = smul.addr %s546, 8
      %s550 = sadd.s32 %s548, %s549
      %s551 = smul.addr %s550, 8
      %s552 = scalar_lea.vmem %s1, %s551
      %p553 = pneg %p98
      %p554 = pneg %p95
      %p555 = scmp.lt.s32.totalorder %s31, 1
      %s556 = scalar_select %p555, %s31, 1
      %p557 = scmp.lt.s32.totalorder %s32, 0
      %s558 = scalar_select %p557, %s32, 0
      %s559 = sadd.s32 %s558, %s556
      %s560 = smul.addr %s559, 4
      %s561 = scalar_lea.vmem %s2, %s560
      %p562 = pneg %p126
      %p563 = pneg %p123
      %s564 = sadd.s32 %s33, %s32
      %p565 = scmp.lt.s32.totalorder %s31, 1
      %s566 = scalar_select %p565, %s31, 1
      %p567 = scmp.lt.s32.totalorder %s564, 7
      %s568 = scalar_select %p567, %s564, 7
      %s569 = smul.addr %s566, 8
      %s570 = sadd.s32 %s568, %s569
      %s571 = smul.addr %s570, 4
      %s572 = scalar_lea.vmem %s3, %s571
      %p573 = pneg %p156
      %p574 = pneg %p153
      %p575 = scmp.lt.s32.totalorder %s31, 1
      %s576 = scalar_select %p575, %s31, 1
      %p577 = scmp.lt.s32.totalorder %s32, 0
      %s578 = scalar_select %p577, %s32, 0
      %s579 = smul.addr %s576, 2
      %s580 = sadd.s32 %s578, %s579
      %s581 = smul.addr %s580, 4
      %s582 = scalar_lea.vmem %s4, %s581
      %p583 = pneg %p184
      %p584 = pneg %p181
      %p585 = pneg %p205
      %p586 = pneg %p202
      %p587 = pneg %p226
      %p588 = pneg %p223
      %p589 = pneg %p247
      %p590 = pneg %p244
      %p591 = pneg %p268
      %p592 = pneg %p265
      %p593 = pneg %p289
      %p594 = pneg %p286
      %p595 = pneg %p310
      %p596 = pneg %p307
      %p597 = pneg %p331
      %p598 = pneg %p328
      %p599 = pneg %p352
      %p600 = pneg %p349
      %p601 = pneg %p373
      %p602 = pneg %p370
      %p603 = pneg %p394
      %p604 = pneg %p391
      %p605 = pneg %p422
      %p606 = pneg %p419
      %p607 = scmp.lt.s32.totalorder %s31, 1
      %s608 = scalar_select %p607, %s31, 1
      %p609 = scmp.lt.s32.totalorder %s32, 0
      %s610 = scalar_select %p609, %s32, 0
      %s611 = smul.addr %s608, 4
      %s612 = sadd.s32 %s610, %s611
      %s613 = smul.addr %s612, 8
      %s614 = scalar_lea.vmem %s15, %s613
      %p615 = scmp.lt.s32.totalorder %s31, 1
      %s616 = scalar_select %p615, %s31, 1
      %p617 = scmp.lt.s32.totalorder %s32, 0
      %s618 = scalar_select %p617, %s32, 0
      %s619 = sadd.s32 %s618, %s616
      %s620 = smul.addr %s619, 8
      %s621 = scalar_lea.vmem %s0, %s620
      %s622 = sadd.s32 %s33, %s32
      %p623 = scmp.lt.s32.totalorder %s31, 1
      %s624 = scalar_select %p623, %s31, 1
      %p625 = scmp.lt.s32.totalorder %s622, 7
      %s626 = scalar_select %p625, %s622, 7
      %s627 = smul.addr %s624, 8
      %s628 = sadd.s32 %s626, %s627
      %s629 = smul.addr %s628, 8
      %s630 = scalar_lea.vmem %s1, %s629
      %s631 = sadd.s32 %s33, %s32
      %p632 = scmp.lt.s32.totalorder %s31, 1
      %s633 = scalar_select %p632, %s31, 1
      %p634 = scmp.lt.s32.totalorder %s32, 0
      %s635 = scalar_select %p634, %s32, 0
      %s636 = sadd.s32 %s635, %s633
      %s637 = smul.addr %s636, 4
      %s638 = scalar_lea.vmem %s2, %s637
      %s639 = sadd.s32 %s33, %s32
      %p640 = scmp.lt.s32.totalorder %s31, 1
      %s641 = scalar_select %p640, %s31, 1
      %p642 = scmp.lt.s32.totalorder %s639, 7
      %s643 = scalar_select %p642, %s639, 7
      %s644 = smul.addr %s641, 8
      %s645 = sadd.s32 %s643, %s644
      %s646 = smul.addr %s645, 4
      %s647 = scalar_lea.vmem %s3, %s646
      %s648 = sadd.s32 %s33, %s32
      %p649 = scmp.lt.s32.totalorder %s31, 1
      %s650 = scalar_select %p649, %s31, 1
      %p651 = scmp.lt.s32.totalorder %s32, 0
      %s652 = scalar_select %p651, %s32, 0
      %s653 = smul.addr %s650, 2
      %s654 = sadd.s32 %s652, %s653
      %s655 = smul.addr %s654, 4
      %s656 = scalar_lea.vmem %s4, %s655
      %p657 = scmp.lt.s32.totalorder %s31, 1
      %s658 = scalar_select %p657, %s31, 1
      %p659 = scmp.lt.s32.totalorder %s32, 0
      %s660 = scalar_select %p659, %s32, 0
      %s661 = smul.addr %s658, 4
      %s662 = sadd.s32 %s660, %s661
      %s663 = smul.addr %s662, 8
      %s664 = scalar_lea.vmem %s15, %s663
      %p666 = scmp.eq.s32.totalorder %s33, 0
      // Predicated region
      $region81: #{_cic_forward_impl.5} parent=79 // pred_check
        %p667 = pneg %p666
      $region82: #{_cic_forward_impl.5} parent=79 // pred_check_branch
        %669 = sbr.rel (%p667) target = $region84
      $region83: #{_cic_forward_impl.5} parent=79 // pred_region
        %v670 = vld [vmem:[%s5] sm:$0xff]
        %v671 = vld [vmem:[%s621] sm:$0xff]
        %v672 = vld [vmem:[%s7] sm:$0xff]
        %674 = vset.pattern.permute.xlu0 0
        %675 = vperm.xlu0 %674, %v672
        %v676 = vpop.permute.xlu0 %675
        %vm678 = vcmask 64512
        %v680 = vsel %vm678, %v670, 0
        %682 = vmatprep.subr.mxu0 0.0
        %683 = vmatpush1.msra.mxu0 0.0
        %684 = vmatprep.subr.mxu0 0.0
        %685 = vmatpush1.msra.mxu0 0.0
        %686 = vmatprep.subr.mxu0 0.0
        %687 = vmatpush1.msra.mxu0 0.0
        %688 = vmatprep.subr.mxu0 0.0
        %689 = vmatpush1.msra.mxu0 0.0
        %690 = vmatprep.subr.mxu0 0.0
        %691 = vmatpush1.msra.mxu0 0.0
        %692 = vmatprep.subr.mxu0 0.0
        %693 = vmatpush1.msra.mxu0 0.0
        %694 = vmatprep.subr.mxu0 0.0
        %695 = vmatpush1.msra.mxu0 0.0
        %696 = vmatprep.subr.mxu0 0.0
        %697 = vmatpush1.msra.mxu0 0.0
        %698 = vmatprep.subr.mxu0 0.0
        %699 = vmatpush1.msra.mxu0 0.0
        %700 = vmatprep.subr.mxu0 0.0
        %701 = vmatpush1.msra.mxu0 0.0
        %702 = vmatprep.subr.mxu0 0.0
        %703 = vmatpush1.msra.mxu0 0.0
        %704 = vmatprep.subr.mxu0 0.0
        %705 = vmatpush1.msra.mxu0 0.0
        %706 = vmatprep.subr.mxu0 0.0
        %707 = vmatpush1.msra.mxu0 0.0
        %708 = vmatprep.subr.mxu0 0.0
        %709 = vmatpush1.msra.mxu0 0.0
        %710 = vmatprep.subr.mxu0 0.0
        %711 = vmatpush1.msra.mxu0 0.0
        %712 = vmatprep.subr.mxu0 0.0
        %713 = vmatpush1.msra.mxu0 %v671
        %714 = vmatprep.subr.mxu0 0.0
        %715 = vmatpush2.msra.mxu0 0.0
        %716 = vmatprep.subr.mxu0 0.0
        %717 = vmatpush2.msra.mxu0 0.0
        %718 = vmatprep.subr.mxu0 0.0
        %719 = vmatpush2.msra.mxu0 0.0
        %720 = vmatprep.subr.mxu0 0.0
        %721 = vmatpush2.msra.mxu0 0.0
        %722 = vmatprep.subr.mxu0 0.0
        %723 = vmatpush2.msra.mxu0 0.0
        %724 = vmatprep.subr.mxu0 0.0
        %725 = vmatpush2.msra.mxu0 0.0
        %726 = vmatprep.subr.mxu0 0.0
        %727 = vmatpush2.msra.mxu0 0.0
        %728 = vmatprep.subr.mxu0 0.0
        %729 = vmatpush2.msra.mxu0 0.0
        %730 = vmatprep.subr.mxu0 0.0
        %731 = vmatpush2.msra.mxu0 0.0
        %732 = vmatprep.subr.mxu0 0.0
        %733 = vmatpush2.msra.mxu0 0.0
        %734 = vmatprep.subr.mxu0 0.0
        %735 = vmatpush2.msra.mxu0 0.0
        %736 = vmatprep.subr.mxu0 0.0
        %737 = vmatpush2.msra.mxu0 0.0
        %738 = vmatprep.subr.mxu0 0.0
        %739 = vmatpush2.msra.mxu0 0.0
        %740 = vmatprep.subr.mxu0 0.0
        %741 = vmatpush2.msra.mxu0 0.0
        %742 = vmatprep.subr.mxu0 0.0
        %743 = vmatpush2.msra.mxu0 0.0
        %744 = vmatprep.subr.mxu0 0.0
        %745 = vmatpush2.msra.mxu0 0.0
        %746 = vmatprep.mubr.f32.mxu0 0.0
        %747 = vmatmul.mubr.f32.gmra.mxu0 %v680
        %v748 = vpop.f32.mrf.mxu0
        %v749 = vadd.f32 %v676, %v748
        %v750 = vpop.f32.mrf.mxu0
        %751 = vdwg.mxu0
        %752 = vst [vmem:[#allocation2] sm:$0xff] %v749
        %753 = vst [vmem:[#allocation3] sm:$0xff] 0.0
      $region84: #{_cic_forward_impl.5} parent=79 // pred_fallthru
        _
      %v754 = vld [vmem:[#allocation2] sm:$0xff]
      %v755 = vld [vmem:[%s6] sm:$0xff]
      %v756 = vld [vmem:[%s630] sm:$0xff]
      %vm757 = vcmask 64512
      %v759 = vsel %vm757, %v755, 0
      %761 = vmatprep.subr.mxu0 0.0
      %762 = vmatpush1.msra.mxu0 0.0
      %763 = vmatprep.subr.mxu0 0.0
      %764 = vmatpush1.msra.mxu0 0.0
      %765 = vmatprep.subr.mxu0 0.0
      %766 = vmatpush1.msra.mxu0 0.0
      %767 = vmatprep.subr.mxu0 0.0
      %768 = vmatpush1.msra.mxu0 0.0
      %769 = vmatprep.subr.mxu0 0.0
      %770 = vmatpush1.msra.mxu0 0.0
      %771 = vmatprep.subr.mxu0 0.0
      %772 = vmatpush1.msra.mxu0 0.0
      %773 = vmatprep.subr.mxu0 0.0
      %774 = vmatpush1.msra.mxu0 0.0
      %775 = vmatprep.subr.mxu0 0.0
      %776 = vmatpush1.msra.mxu0 0.0
      %777 = vmatprep.subr.mxu0 0.0
      %778 = vmatpush1.msra.mxu0 0.0
      %779 = vmatprep.subr.mxu0 0.0
      %780 = vmatpush1.msra.mxu0 0.0
      %781 = vmatprep.subr.mxu0 0.0
      %782 = vmatpush1.msra.mxu0 0.0
      %783 = vmatprep.subr.mxu0 0.0
      %784 = vmatpush1.msra.mxu0 0.0
      %785 = vmatprep.subr.mxu0 0.0
      %786 = vmatpush1.msra.mxu0 0.0
      %787 = vmatprep.subr.mxu0 0.0
      %788 = vmatpush1.msra.mxu0 0.0
      %789 = vmatprep.subr.mxu0 0.0
      %790 = vmatpush1.msra.mxu0 0.0
      %791 = vmatprep.subr.mxu0 0.0
      %792 = vmatpush1.msra.mxu0 %v756
      %793 = vmatprep.subr.mxu0 0.0
      %794 = vmatpush2.msra.mxu0 0.0
      %795 = vmatprep.subr.mxu0 0.0
      %796 = vmatpush2.msra.mxu0 0.0
      %797 = vmatprep.subr.mxu0 0.0
      %798 = vmatpush2.msra.mxu0 0.0
      %799 = vmatprep.subr.mxu0 0.0
      %800 = vmatpush2.msra.mxu0 0.0
      %801 = vmatprep.subr.mxu0 0.0
      %802 = vmatpush2.msra.mxu0 0.0
      %803 = vmatprep.subr.mxu0 0.0
      %804 = vmatpush2.msra.mxu0 0.0
      %805 = vmatprep.subr.mxu0 0.0
      %806 = vmatpush2.msra.mxu0 0.0
      %807 = vmatprep.subr.mxu0 0.0
      %808 = vmatpush2.msra.mxu0 0.0
      %809 = vmatprep.subr.mxu0 0.0
      %810 = vmatpush2.msra.mxu0 0.0
      %811 = vmatprep.subr.mxu0 0.0
      %812 = vmatpush2.msra.mxu0 0.0
      %813 = vmatprep.subr.mxu0 0.0
      %814 = vmatpush2.msra.mxu0 0.0
      %815 = vmatprep.subr.mxu0 0.0
      %816 = vmatpush2.msra.mxu0 0.0
      %817 = vmatprep.subr.mxu0 0.0
      %818 = vmatpush2.msra.mxu0 0.0
      %819 = vmatprep.subr.mxu0 0.0
      %820 = vmatpush2.msra.mxu0 0.0
      %821 = vmatprep.subr.mxu0 0.0
      %822 = vmatpush2.msra.mxu0 0.0
      %823 = vmatprep.subr.mxu0 0.0
      %824 = vmatpush2.msra.mxu0 0.0
      %825 = vmatprep.mubr.f32.mxu0 0.0
      %826 = vmatmul.mubr.f32.gmra.mxu0 %v759
      %v827 = vpop.f32.mrf.mxu0
      %v828 = vadd.f32 0.0, %v827
      %v829 = vpop.f32.mrf.mxu0
      %830 = vdwg.mxu0
      %v831 = vadd.f32 %v754, %v828
      %v832 = vld [vmem:[%s647] sm:$0xf]
      %v833 = vunpack.c.l.bf16 %v832
      %v834 = vld [vmem:[%s638] sm:$0xf]
      %v835 = vunpack.c.l.bf16 %v834
      %v836 = vsub.f32 %v833, %v835
      %v837 = vadd.f32 %v836, %v831
      %vm838 = vcmp.ge.f32.partialorder %v837, 0.0
      %v839 = vmul.f32 %v837, 0.2
      %v840 = vsel %vm838, %v837, %v839
      %v841 = vld [vmem:[%s8] sm:$0xf]
      %v842 = vpack.c.bf16 %v840, %v840
      %v843 = vld [vmem:[%s9] sm:$0xff]
      %845 = vset.pattern.permute.xlu0 0
      %846 = vperm.xlu0 %845, %v843
      %v847 = vpop.permute.xlu0 %846
      %v850 = vsel %vm757, %v841, 0
      %vm852 = vcmask 1043456
      %v854 = vsel %vm852, %v842, 0
      %856 = vmatprep.subr.bf16.mxu0 0
      %857 = vmatpush1.bf16.msra.mxu0 0
      %858 = vmatprep.subr.bf16.mxu0 0
      %859 = vmatpush1.bf16.msra.mxu0 0
      %860 = vmatprep.subr.bf16.mxu0 0
      %861 = vmatpush1.bf16.msra.mxu0 0
      %862 = vmatprep.subr.bf16.mxu0 0
      %863 = vmatpush1.bf16.msra.mxu0 0
      %864 = vmatprep.subr.bf16.mxu0 0
      %865 = vmatpush1.bf16.msra.mxu0 0
      %866 = vmatprep.subr.bf16.mxu0 0
      %867 = vmatpush1.bf16.msra.mxu0 0
      %868 = vmatprep.subr.bf16.mxu0 0
      %869 = vmatpush1.bf16.msra.mxu0 0
      %870 = vmatprep.subr.bf16.mxu0 0
      %871 = vmatpush1.bf16.msra.mxu0 %v854
      %872 = vmatprep.subr.bf16.mxu0 0
      %873 = vmatpush2.bf16.msra.mxu0 0
      %874 = vmatprep.subr.bf16.mxu0 0
      %875 = vmatpush2.bf16.msra.mxu0 0
      %876 = vmatprep.subr.bf16.mxu0 0
      %877 = vmatpush2.bf16.msra.mxu0 0
      %878 = vmatprep.subr.bf16.mxu0 0
      %879 = vmatpush2.bf16.msra.mxu0 0
      %880 = vmatprep.subr.bf16.mxu0 0
      %881 = vmatpush2.bf16.msra.mxu0 0
      %882 = vmatprep.subr.bf16.mxu0 0
      %883 = vmatpush2.bf16.msra.mxu0 0
      %884 = vmatprep.subr.bf16.mxu0 0
      %885 = vmatpush2.bf16.msra.mxu0 0
      %886 = vmatprep.subr.bf16.mxu0 0
      %887 = vmatpush2.bf16.msra.mxu0 0
      %888 = vmatprep.mubr.bf16.mxu0 0
      %889 = vmatmul.mubr.bf16.gmra.mxu0 %v850
      %v890 = vpop.f32.mrf.mxu0
      %v891 = vadd.f32 %v847, %v890
      %v892 = vpop.f32.mrf.mxu0
      %v893 = vpop.f32.mrf.mxu0
      %v894 = vpop.f32.mrf.mxu0
      %895 = vdwg.mxu0
      %vm896 = vcmp.ge.f32.partialorder %v891, 0.0
      %v897 = vmul.f32 %v891, 0.2
      %v898 = vsel %vm896, %v891, %v897
      %v899 = vld [vmem:[%s10] sm:$0xf]
      %v900 = vpack.c.bf16 %v898, %v898
      %v901 = vld [vmem:[%s11] sm:$0xff]
      %903 = vset.pattern.permute.xlu0 0
      %904 = vperm.xlu0 %903, %v901
      %v905 = vpop.permute.xlu0 %904
      %v908 = vsel %vm757, %v899, 0
      %v911 = vsel %vm852, %v900, 0
      %913 = vmatprep.subr.bf16.mxu0 0
      %914 = vmatpush1.bf16.msra.mxu0 0
      %915 = vmatprep.subr.bf16.mxu0 0
      %916 = vmatpush1.bf16.msra.mxu0 0
      %917 = vmatprep.subr.bf16.mxu0 0
      %918 = vmatpush1.bf16.msra.mxu0 0
      %919 = vmatprep.subr.bf16.mxu0 0
      %920 = vmatpush1.bf16.msra.mxu0 0
      %921 = vmatprep.subr.bf16.mxu0 0
      %922 = vmatpush1.bf16.msra.mxu0 0
      %923 = vmatprep.subr.bf16.mxu0 0
      %924 = vmatpush1.bf16.msra.mxu0 0
      %925 = vmatprep.subr.bf16.mxu0 0
      %926 = vmatpush1.bf16.msra.mxu0 0
      %927 = vmatprep.subr.bf16.mxu0 0
      %928 = vmatpush1.bf16.msra.mxu0 %v911
      %929 = vmatprep.subr.bf16.mxu0 0
      %930 = vmatpush2.bf16.msra.mxu0 0
      %931 = vmatprep.subr.bf16.mxu0 0
      %932 = vmatpush2.bf16.msra.mxu0 0
      %933 = vmatprep.subr.bf16.mxu0 0
      %934 = vmatpush2.bf16.msra.mxu0 0
      %935 = vmatprep.subr.bf16.mxu0 0
      %936 = vmatpush2.bf16.msra.mxu0 0
      %937 = vmatprep.subr.bf16.mxu0 0
      %938 = vmatpush2.bf16.msra.mxu0 0
      %939 = vmatprep.subr.bf16.mxu0 0
      %940 = vmatpush2.bf16.msra.mxu0 0
      %941 = vmatprep.subr.bf16.mxu0 0
      %942 = vmatpush2.bf16.msra.mxu0 0
      %943 = vmatprep.subr.bf16.mxu0 0
      %944 = vmatpush2.bf16.msra.mxu0 0
      %945 = vmatprep.mubr.bf16.mxu0 0
      %946 = vmatmul.mubr.bf16.gmra.mxu0 %v908
      %v947 = vpop.f32.mrf.mxu0
      %v948 = vadd.f32 %v905, %v947
      %v949 = vpop.f32.mrf.mxu0
      %v950 = vpop.f32.mrf.mxu0
      %v951 = vpop.f32.mrf.mxu0
      %952 = vdwg.mxu0
      %vm953 = vcmp.ge.f32.partialorder %v948, 0.0
      %v954 = vmul.f32 %v948, 0.2
      %v955 = vsel %vm953, %v948, %v954
      %v956 = vld [vmem:[#allocation3] sm:$0xff]
      %v957 = vadd.f32 %v956, %v955
      %958 = vst [vmem:[#allocation3] sm:$0xff] %v957
      %p959 = scmp.eq.s32.totalorder %s33, 7
      // Predicated region
      $region85: #{_cic_forward_impl.5} parent=79 // pred_check
        %p960 = pneg %p959
      $region86: #{_cic_forward_impl.5} parent=79 // pred_check_branch
        %962 = sbr.rel (%p960) target = $region88
      $region87: #{_cic_forward_impl.5} parent=79 // pred_region
        %v963 = vld [vmem:[#allocation3] sm:$0xff]
        %v964 = vmul.f32 %v963, 0.125
        %v965 = vpack.c.bf16 %v964, %v964
        %v966 = vld [vmem:[%s12] sm:$0xf]
        %v967 = vld [vmem:[%s12 + $0x4] sm:$0xf]
        %v968 = vld [vmem:[%s12 + $0x8] sm:$0xf]
        %v969 = vld [vmem:[%s12 + $0xc] sm:$0xf]
        %v970 = vld [vmem:[%s13] sm:$0xf]
        %v971 = vld [vmem:[%s13 + $0x4] sm:$0xf]
        %v972 = vld [vmem:[%s13 + $0x8] sm:$0xf]
        %v973 = vld [vmem:[%s13 + $0xc] sm:$0xf]
        %v974 = vld [vmem:[%s656] sm:$0xf]
        %v975 = vld [vmem:[%s656 + $0x4] sm:$0xf]
        %v980 = vunpack.c.l.b16 %v970
        %v981 = vunpack.c.l.b16 %v971
        %v982 = vunpack.c.l.b16 %v972
        %v983 = vunpack.c.l.b16 %v973
        %v984 = vpack.c.b16 %v981, %v980
        %v985 = vpack.c.b16 %v983, %v982
        %v988 = vunpack.c.l.b16 %v974
        %v989 = vunpack.c.l.b16 %v975
        %v990 = vpack.c.b16 %v989, %v988
        %vm992 = vcmask 130048
        %v994 = vsel %vm992, %v984, 0
        %v997 = vsel %vm992, %v985, 0
        %999 = vmatprep.subr.bf16.mxu0 0
        %1000 = vmatpush1.bf16.msra.mxu0 0
        %1001 = vmatprep.subr.bf16.mxu0 0
        %1002 = vmatpush1.bf16.msra.mxu0 0
        %1003 = vmatprep.subr.bf16.mxu0 0
        %1004 = vmatpush1.bf16.msra.mxu0 0
        %1005 = vmatprep.subr.bf16.mxu0 0
        %1006 = vmatpush1.bf16.msra.mxu0 0
        %1007 = vmatprep.subr.bf16.mxu0 0
        %1008 = vmatpush1.bf16.msra.mxu0 0
        %1009 = vmatprep.subr.bf16.mxu0 0
        %1010 = vmatpush1.bf16.msra.mxu0 0
        %1011 = vmatprep.subr.bf16.mxu0 0
        %1012 = vmatpush1.bf16.msra.mxu0 0
        %1013 = vmatprep.subr.bf16.mxu0 0
        %1014 = vmatpush1.bf16.msra.mxu0 %v990
        %1015 = vmatprep.subr.bf16.mxu0 0
        %1016 = vmatpush2.bf16.msra.mxu0 0
        %1017 = vmatprep.subr.bf16.mxu0 0
        %1018 = vmatpush2.bf16.msra.mxu0 0
        %1019 = vmatprep.subr.bf16.mxu0 0
        %1020 = vmatpush2.bf16.msra.mxu0 0
        %1021 = vmatprep.subr.bf16.mxu0 0
        %1022 = vmatpush2.bf16.msra.mxu0 0
        %1023 = vmatprep.subr.bf16.mxu0 0
        %1024 = vmatpush2.bf16.msra.mxu0 0
        %1025 = vmatprep.subr.bf16.mxu0 0
        %1026 = vmatpush2.bf16.msra.mxu0 0
        %1027 = vmatprep.subr.bf16.mxu0 0
        %1028 = vmatpush2.bf16.msra.mxu0 0
        %1029 = vmatprep.subr.bf16.mxu0 0
        %1030 = vmatpush2.bf16.msra.mxu0 0
        %1031 = vmatprep.mubr.bf16.mxu0 0
        %1032 = vmatmul.mubr.bf16.gmra.mxu0 %v994
        %v1033 = vpop.f32.mrf.mxu0
        %v1034 = vadd.f32 0.0, %v1033
        %v1035 = vpop.f32.mrf.mxu0
        %v1036 = vpop.f32.mrf.mxu0
        %v1037 = vadd.f32 0.0, %v1036
        %v1038 = vpop.f32.mrf.mxu0
        %1039 = vmatprep.mubr.bf16.mxu0 0
        %1040 = vmatmul.mubr.bf16.gmra.mxu0 %v997
        %v1041 = vpop.f32.mrf.mxu0
        %v1042 = vadd.f32 0.0, %v1041
        %v1043 = vpop.f32.mrf.mxu0
        %v1044 = vpop.f32.mrf.mxu0
        %v1045 = vadd.f32 0.0, %v1044
        %v1046 = vpop.f32.mrf.mxu0
        %1047 = vdwg.mxu0
        %v1052 = vunpack.c.l.b16 %v966
        %v1053 = vunpack.c.l.b16 %v967
        %v1054 = vunpack.c.l.b16 %v968
        %v1055 = vunpack.c.l.b16 %v969
        %v1056 = vpack.c.b16 %v1053, %v1052
        %v1057 = vpack.c.b16 %v1055, %v1054
        %v1059 = vsel %vm757, %v1056, 0
        %v1062 = vsel %vm757, %v1057, 0
        %v1065 = vsel %vm852, %v965, 0
        %1067 = vmatprep.subr.bf16.mxu0 0
        %1068 = vmatpush1.bf16.msra.mxu0 0
        %1069 = vmatprep.subr.bf16.mxu0 0
        %1070 = vmatpush1.bf16.msra.mxu0 0
        %1071 = vmatprep.subr.bf16.mxu0 0
        %1072 = vmatpush1.bf16.msra.mxu0 0
        %1073 = vmatprep.subr.bf16.mxu0 0
        %1074 = vmatpush1.bf16.msra.mxu0 0
        %1075 = vmatprep.subr.bf16.mxu0 0
        %1076 = vmatpush1.bf16.msra.mxu0 0
        %1077 = vmatprep.subr.bf16.mxu0 0
        %1078 = vmatpush1.bf16.msra.mxu0 0
        %1079 = vmatprep.subr.bf16.mxu0 0
        %1080 = vmatpush1.bf16.msra.mxu0 0
        %1081 = vmatprep.subr.bf16.mxu0 0
        %1082 = vmatpush1.bf16.msra.mxu0 %v1065
        %1083 = vmatprep.subr.bf16.mxu0 0
        %1084 = vmatpush2.bf16.msra.mxu0 0
        %1085 = vmatprep.subr.bf16.mxu0 0
        %1086 = vmatpush2.bf16.msra.mxu0 0
        %1087 = vmatprep.subr.bf16.mxu0 0
        %1088 = vmatpush2.bf16.msra.mxu0 0
        %1089 = vmatprep.subr.bf16.mxu0 0
        %1090 = vmatpush2.bf16.msra.mxu0 0
        %1091 = vmatprep.subr.bf16.mxu0 0
        %1092 = vmatpush2.bf16.msra.mxu0 0
        %1093 = vmatprep.subr.bf16.mxu0 0
        %1094 = vmatpush2.bf16.msra.mxu0 0
        %1095 = vmatprep.subr.bf16.mxu0 0
        %1096 = vmatpush2.bf16.msra.mxu0 0
        %1097 = vmatprep.subr.bf16.mxu0 0
        %1098 = vmatpush2.bf16.msra.mxu0 0
        %1099 = vmatprep.mubr.bf16.mxu0 0
        %1100 = vmatmul.mubr.bf16.gmra.mxu0 %v1059
        %v1101 = vpop.f32.mrf.mxu0
        %v1102 = vadd.f32 %v1034, %v1101
        %v1103 = vpop.f32.mrf.mxu0
        %v1104 = vpop.f32.mrf.mxu0
        %v1105 = vadd.f32 %v1037, %v1104
        %v1106 = vpop.f32.mrf.mxu0
        %1107 = vmatprep.mubr.bf16.mxu0 0
        %1108 = vmatmul.mubr.bf16.gmra.mxu0 %v1062
        %v1109 = vpop.f32.mrf.mxu0
        %v1110 = vadd.f32 %v1042, %v1109
        %v1111 = vpop.f32.mrf.mxu0
        %v1112 = vpop.f32.mrf.mxu0
        %v1113 = vadd.f32 %v1045, %v1112
        %v1114 = vpop.f32.mrf.mxu0
        %1115 = vdwg.mxu0
        %v1116 = vld [vmem:[%s14] sm:$0xff]
        %v1117 = vld [vmem:[%s14 + $0x8] sm:$0xff]
        %v1118 = vld [vmem:[%s14 + $0x10] sm:$0xff]
        %v1119 = vld [vmem:[%s14 + $0x18] sm:$0xff]
        %1121 = vset.pattern.permute.xlu0 0
        %1122 = vperm.xlu0 %1121, %v1116
        %v1123 = vpop.permute.xlu0 %1122
        %1126 = vset.pattern.permute.xlu0 0
        %1127 = vperm.xlu0 %1126, %v1117
        %v1128 = vpop.permute.xlu0 %1127
        %1131 = vset.pattern.permute.xlu0 0
        %1132 = vperm.xlu0 %1131, %v1118
        %v1133 = vpop.permute.xlu0 %1132
        %1136 = vset.pattern.permute.xlu0 0
        %1137 = vperm.xlu0 %1136, %v1119
        %v1138 = vpop.permute.xlu0 %1137
        %v1140 = vadd.f32 %v1102, %v1123
        %v1141 = vadd.f32 %v1105, %v1128
        %v1142 = vadd.f32 %v1110, %v1133
        %v1143 = vadd.f32 %v1113, %v1138
        %vm1144 = vcmp.ge.f32.partialorder %v1140, 0.0
        %vm1145 = vcmp.ge.f32.partialorder %v1141, 0.0
        %vm1146 = vcmp.ge.f32.partialorder %v1142, 0.0
        %vm1147 = vcmp.ge.f32.partialorder %v1143, 0.0
        %v1148 = vmul.f32 %v1140, 0.2
        %v1149 = vmul.f32 %v1141, 0.2
        %v1150 = vmul.f32 %v1142, 0.2
        %v1151 = vmul.f32 %v1143, 0.2
        %v1152 = vsel %vm1144, %v1140, %v1148
        %v1153 = vsel %vm1145, %v1141, %v1149
        %v1154 = vsel %vm1146, %v1142, %v1150
        %v1155 = vsel %vm1147, %v1143, %v1151
        %1156 = vst [vmem:[%s664] sm:$0xff] %v1152
        %1157 = vst [vmem:[%s664 + $0x8] sm:$0xff] %v1153
        %1158 = vst [vmem:[%s664 + $0x10] sm:$0xff] %v1154
        %1159 = vst [vmem:[%s664 + $0x18] sm:$0xff] %v1155
      $region88: #{_cic_forward_impl.5} parent=79 // pred_fallthru
        _
      %p1160 = scmp.lt.s32.totalorder %s31, 1
      %s1161 = scalar_select %p1160, %s31, 1
      %p1162 = scmp.lt.s32.totalorder %s32, 0
      %s1163 = scalar_select %p1162, %s32, 0
      %s1164 = smul.addr %s1161, 4
      %s1165 = sadd.s32 %s1163, %s1164
      %s1166 = smul.addr %s1165, 8
      %s1167 = scalar_lea.vmem %s15, %s1166
      // Predicated region
      $region89: #{_cic_forward_impl.5} parent=79 // pred_check
        %p1168 = pneg %p419
      $region90: #{_cic_forward_impl.5} parent=79 // pred_check_branch
        %1170 = sbr.rel (%p1168) target = $region92
      $region91: #{_cic_forward_impl.5} parent=79 // pred_region
        _
      $region92: #{_cic_forward_impl.5} parent=79 // pred_fallthru
        _
    $region80: #{_cic_forward_impl.5} parent=5 // pred_fallthru
      _
    %p1171 = scmp.le.s32.totalorder 2, %s21
    // Predicated region
    $region93: #{_cic_forward_impl.5} parent=5 // pred_check
      %p1172 = pneg %p1171
    $region94: #{_cic_forward_impl.5} parent=5 // pred_check_branch
      %1174 = sbr.rel (%p1172) target = $region96
    $region95: #{_cic_forward_impl.5} parent=5 // pred_region
      %s1175 = ssub.s32 %s21, 2
      // Predicated region
      $region97: #{_cic_forward_impl.5} parent=95 // pred_check
        %p1176 = pneg %p425
      $region98: #{_cic_forward_impl.5} parent=95 // pred_check_branch
        %1178 = sbr.rel (%p1176) target = $region100
      $region99: #{_cic_forward_impl.5} parent=95 // pred_region
        %p1179 = scmp.lt.s32.totalorder %s34, 1
        %s1180 = scalar_select %p1179, %s34, 1
        %p1181 = scmp.lt.s32.totalorder %s35, 0
        %s1182 = scalar_select %p1181, %s35, 0
        %s1183 = smul.addr %s1180, 4
        %s1184 = sadd.s32 %s1182, %s1183
        %s1185 = smul.addr %s1184, 8
        %s1186 = scalar_lea.vmem %s15, %s1185
      $region100: #{_cic_forward_impl.5} parent=95 // pred_fallthru
        _
    $region96: #{_cic_forward_impl.5} parent=5 // pred_fallthru
      _
  $region6: #{_cic_forward_impl.5} parent=0 // loop_footer
    %s25 = sadd.s32 1, %s21
  $region7: #{_cic_forward_impl.5} parent=0 // loop_footer_branch
    %20 = sbr.rel target = $region3
  $region8: #{_cic_forward_impl.5} parent=0 // loop_exit
    _

</llo_original>
